<compile_context>
chip_gen: v7x
topology: tpu7x:2x2x1
jax: 0.10.0
libtpu: 0.0.40
codegen_flags: <defaults>
</compile_context>

<pallas_src>
import functools

import jax
import jax.numpy as jnp
from jax.experimental import pallas as pl
from jax.experimental.pallas import tpu as pltpu


def _self_attention_kernel(x_ref, wqkv_ref, wo_ref, bo_ref, o_ref, *,
                           batch, seq, heads, dim_heads):
    # x_ref:   (B*T, D)      f32
    # wqkv:    (D, 3*H*E)    bf16   columns ordered [q heads | k heads | v heads]
    # wo:      (H*E, D)      bf16
    # bo:      (1, D)        f32
    # o_ref:   (B*T, D)
    b, t, h, e = batch, seq, heads, dim_heads
    he = h * e
    scale = e ** -0.5

    x = x_ref[...].astype(jnp.bfloat16)                                     # (B*T, D)

    # Fused Q/K/V projection: one MXU pass with 3*H*E output lanes live.
    qkv = jnp.dot(x, wqkv_ref[...], preferred_element_type=jnp.float32)     # (B*T, 3*H*E) f32

    # Per-head attention core in f32 (H is small & static -> unrolled at trace time).
    # Head outputs stay packed on the lane axis so the output projection needs no
    # transpose afterwards.
    o_parts = []
    for hi in range(h):
        q_h = qkv[:, hi * e:(hi + 1) * e].reshape(b, t, e)                  # (B, T, E)
        k_h = qkv[:, he + hi * e: he + (hi + 1) * e].reshape(b, t, e)       # (B, T, E)
        v_h = qkv[:, 2 * he + hi * e: 2 * he + (hi + 1) * e].reshape(b, t, e)

        # Contract the E dims directly (no materialized K transpose).
        s = jnp.einsum('bie,bje->bij', q_h, k_h,
                       preferred_element_type=jnp.float32) * scale          # (B, T, T) f32
        s = s - jnp.max(s, axis=-1, keepdims=True)
        p = jnp.exp(s)
        p = p / jnp.sum(p, axis=-1, keepdims=True)                           # exact denominator
        o_parts.append(jnp.einsum('bij,bje->bie', p, v_h,
                                  preferred_element_type=jnp.float32))       # (B, T, E) f32

    # Heads packed on the lane axis -> single lane-dense output projection; the head
    # sum happens for free inside the MXU contraction.
    o_all = jnp.concatenate(o_parts, axis=-1).reshape(b * t, he)             # (B*T, H*E)
    out = jnp.dot(o_all.astype(jnp.bfloat16), wo_ref[...],
                  preferred_element_type=jnp.float32)                        # (B*T, D) f32
    out = out + bo_ref[...].astype(jnp.float32)

    o_ref[...] = out.astype(o_ref.dtype)


def self_attention(x, wq, wkv, wo, bo, *, heads, dim_heads):
    """x: (B, T, D).  wq: (H*E, D), wkv: (2*H*E, D), wo: (D, H*E), bo: (D,)
    (PyTorch nn.Linear weight layout, i.e. (out_features, in_features))."""
    B, T, D = x.shape
    h, e = heads, dim_heads
    he = h * e

    # Host-side layout glue only: fuse Q/K/V weights into one (D, 3*H*E) array
    # (column order matches the head-major feature order the PyTorch module uses),
    # transpose Wo, cast weights to bf16 for the MXU.
    wqkv = jnp.concatenate([wq.T, wkv[:he].T, wkv[he:].T], axis=1).astype(jnp.bfloat16)
    wo_t = wo.T.astype(jnp.bfloat16)                                         # (H*E, D)
    bo2 = bo.reshape(1, D).astype(jnp.float32)

    x2d = x.reshape(B * T, D)

    kernel = functools.partial(_self_attention_kernel,
                               batch=B, seq=T, heads=h, dim_heads=e)

    # Single invocation, whole arrays resident in VMEM (tiny shapes -> the grid loop
    # and per-step DMA/prologue overheads are gone; weights are fetched once).
    # TODO(synk): at real axial-attention sizes, batch many independent rows/columns per
    # pallas_call (lane/sublane-dense output, fills the MXU, "parallel" grid axis for
    # v7x's 2 TensorCores) and tile the (T,T) scores with an online softmax budgeted
    # against v7x's 64 MiB VMEM (set vmem_limit_bytes explicitly).
    out2d = pl.pallas_call(
        kernel,
        out_shape=jax.ShapeDtypeStruct((B * T, D), x.dtype),
        in_specs=[pl.BlockSpec(memory_space=pltpu.MemorySpace.VMEM)
                  for _ in range(4)],
        out_specs=pl.BlockSpec(memory_space=pltpu.MemorySpace.VMEM),
    )(x2d, wqkv, wo_t, bo2)
    return out2d.reshape(B, T, D)


def self_attention_ref(x, wq, wkv, wo, bo, *, heads, dim_heads):
    """Pure-JAX reference matching the PyTorch forward exactly (f32)."""
    b, t, d = x.shape
    h, e = heads, dim_heads
    q = x @ wq.T
    kv = x @ wkv.T
    k, v = jnp.split(kv, 2, axis=-1)

    def merge_heads(y):
        return y.reshape(b, -1, h, e).transpose(0, 2, 1, 3).reshape(b * h, -1, e)

    q, k, v = map(merge_heads, (q, k, v))
    dots = jnp.einsum('bie,bje->bij', q, k) * e ** (-0.5)
    dots = jax.nn.softmax(dots, axis=-1)
    out = jnp.einsum('bij,bje->bie', dots, v)
    out = out.reshape(b, h, -1, e).transpose(0, 2, 1, 3).reshape(b, -1, h * e)
    return out @ wo.T + bo


if __name__ == "__main__":
    # Small shapes consistent with the module.
    B, T, DIM = 2, 8, 32
    HEADS = 4
    DIM_HEADS = DIM // HEADS            # dim_heads=None branch
    DIM_HIDDEN = HEADS * DIM_HEADS      # == 32

    key = jax.random.PRNGKey(0)
    kx, kq, kkv, kwo, kbo = jax.random.split(key, 5)

    x = jax.random.normal(kx, (B, T, DIM), dtype=jnp.float32)
    # nn.Linear weights: (out_features, in_features); deterministic init.
    wq = jax.random.normal(kq, (DIM_HIDDEN, DIM), dtype=jnp.float32) * 0.1
    wkv = jax.random.normal(kkv, (2 * DIM_HIDDEN, DIM), dtype=jnp.float32) * 0.1
    wo = jax.random.normal(kwo, (DIM, DIM_HIDDEN), dtype=jnp.float32) * 0.1
    bo = jax.random.normal(kbo, (DIM,), dtype=jnp.float32) * 0.1

    out = self_attention(x, wq, wkv, wo, bo, heads=HEADS, dim_heads=DIM_HEADS)
    out = jax.block_until_ready(out)

    ref = self_attention_ref(x, wq, wkv, wo, bo, heads=HEADS, dim_heads=DIM_HEADS)
    assert out.shape == (B, T, DIM)
    # f32 attention core + exact softmax denominator -> tighter than the old 5e-2;
    # remaining error is the bf16 cast on the two projection matmuls.
    assert jnp.allclose(out, ref, atol=3e-2, rtol=3e-2), "mismatch vs reference"

    print("KERNEL_OK")
</pallas_src>

<mosaic_0001>
module attributes {stable_mosaic.version = 11 : i64} {
  func.func @_self_attention_kernel(%arg0: memref<16x32xf32, #tpu.memory_space<vmem>>, %arg1: memref<32x96xbf16, #tpu.memory_space<vmem>>, %arg2: memref<32x32xbf16, #tpu.memory_space<vmem>>, %arg3: memref<1x32xf32, #tpu.memory_space<vmem>>, %arg4: memref<16x32xf32, #tpu.memory_space<vmem>>) attributes {dimension_semantics = [], scalar_prefetch = 0 : i64, scratch_operands = 0 : i64, tpu.core_type = #tpu.core_type<tc>} {
    %c0 = arith.constant 0 : index
    %c0_0 = arith.constant 0 : index
    %0 = vector.load %arg0[%c0, %c0_0] : memref<16x32xf32, #tpu.memory_space<vmem>>, vector<16x32xf32>
    %1 = arith.truncf %0 : vector<16x32xf32> to vector<16x32xbf16>
    %c0_1 = arith.constant 0 : index
    %c0_2 = arith.constant 0 : index
    %2 = vector.load %arg1[%c0_1, %c0_2] : memref<32x96xbf16, #tpu.memory_space<vmem>>, vector<32x96xbf16>
    %cst = arith.constant dense<0.000000e+00> : vector<16x96xf32>
    %3 = tpu.matmul %1, %2, %cst {dimension_numbers = #tpu.dot_dimension_numbers<[1], [0], [0], [1], [0, 0, 1, 1], [], []>} : vector<16x32xbf16>, vector<32x96xbf16>, vector<16x96xf32> -> vector<16x96xf32>
    %4 = vector.extract_strided_slice %3 {offsets = [0, 0], sizes = [16, 8], strides = [1, 1]} : vector<16x96xf32> to vector<16x8xf32>
    %5 = vector.shape_cast %4 : vector<16x8xf32> to vector<2x8x8xf32>
    %6 = vector.extract_strided_slice %3 {offsets = [0, 32], sizes = [16, 8], strides = [1, 1]} : vector<16x96xf32> to vector<16x8xf32>
    %7 = vector.shape_cast %6 : vector<16x8xf32> to vector<2x8x8xf32>
    %8 = vector.extract_strided_slice %3 {offsets = [0, 64], sizes = [16, 8], strides = [1, 1]} : vector<16x96xf32> to vector<16x8xf32>
    %9 = vector.shape_cast %8 : vector<16x8xf32> to vector<2x8x8xf32>
    "tpu.trace_start"() <{level = 10 : i32, message = "bie,bje->bij"}> : () -> ()
    %cst_3 = arith.constant dense<0.000000e+00> : vector<2x8x8xf32>
    %10 = tpu.matmul %5, %7, %cst_3 {dimension_numbers = #tpu.dot_dimension_numbers<[2], [2], [1], [1], [0, 0, 0, 1, 1, 1], [0], [0]>} : vector<2x8x8xf32>, vector<2x8x8xf32>, vector<2x8x8xf32> -> vector<2x8x8xf32>
    "tpu.trace_stop"() : () -> ()
    %cst_4 = arith.constant 0.353553385 : f32
    %11 = vector.broadcast %cst_4 : f32 to vector<2x8x8xf32>
    %12 = arith.mulf %10, %11 : vector<2x8x8xf32>
    %cst_5 = arith.constant dense<0xFF800000> : vector<2x8xf32>
    %13 = vector.multi_reduction <maximumf>, %12, %cst_5 [2] : vector<2x8x8xf32> to vector<2x8xf32>
    %14 = vector.shape_cast %13 : vector<2x8xf32> to vector<2x8x1xf32>
    %15 = vector.broadcast %14 : vector<2x8x1xf32> to vector<2x8x8xf32>
    %16 = arith.subf %12, %15 : vector<2x8x8xf32>
    %17 = math.exp %16 : vector<2x8x8xf32>
    %cst_6 = arith.constant dense<0.000000e+00> : vector<2x8xf32>
    %18 = vector.multi_reduction <add>, %17, %cst_6 [2] : vector<2x8x8xf32> to vector<2x8xf32>
    %19 = vector.shape_cast %18 : vector<2x8xf32> to vector<2x8x1xf32>
    %20 = vector.broadcast %19 : vector<2x8x1xf32> to vector<2x8x8xf32>
    %21 = arith.divf %17, %20 : vector<2x8x8xf32>
    "tpu.trace_start"() <{level = 10 : i32, message = "bij,bje->bie"}> : () -> ()
    %cst_7 = arith.constant dense<0.000000e+00> : vector<2x8x8xf32>
    %22 = tpu.matmul %21, %9, %cst_7 {dimension_numbers = #tpu.dot_dimension_numbers<[2], [1], [1], [2], [0, 0, 0, 1, 1, 2], [0], [0]>} : vector<2x8x8xf32>, vector<2x8x8xf32>, vector<2x8x8xf32> -> vector<2x8x8xf32>
    "tpu.trace_stop"() : () -> ()
    %23 = vector.extract_strided_slice %3 {offsets = [0, 8], sizes = [16, 8], strides = [1, 1]} : vector<16x96xf32> to vector<16x8xf32>
    %24 = vector.shape_cast %23 : vector<16x8xf32> to vector<2x8x8xf32>
    %25 = vector.extract_strided_slice %3 {offsets = [0, 40], sizes = [16, 8], strides = [1, 1]} : vector<16x96xf32> to vector<16x8xf32>
    %26 = vector.shape_cast %25 : vector<16x8xf32> to vector<2x8x8xf32>
    %27 = vector.extract_strided_slice %3 {offsets = [0, 72], sizes = [16, 8], strides = [1, 1]} : vector<16x96xf32> to vector<16x8xf32>
    %28 = vector.shape_cast %27 : vector<16x8xf32> to vector<2x8x8xf32>
    "tpu.trace_start"() <{level = 10 : i32, message = "bie,bje->bij"}> : () -> ()
    %cst_8 = arith.constant dense<0.000000e+00> : vector<2x8x8xf32>
    %29 = tpu.matmul %24, %26, %cst_8 {dimension_numbers = #tpu.dot_dimension_numbers<[2], [2], [1], [1], [0, 0, 0, 1, 1, 1], [0], [0]>} : vector<2x8x8xf32>, vector<2x8x8xf32>, vector<2x8x8xf32> -> vector<2x8x8xf32>
    "tpu.trace_stop"() : () -> ()
    %cst_9 = arith.constant 0.353553385 : f32
    %30 = vector.broadcast %cst_9 : f32 to vector<2x8x8xf32>
    %31 = arith.mulf %29, %30 : vector<2x8x8xf32>
    %cst_10 = arith.constant dense<0xFF800000> : vector<2x8xf32>
    %32 = vector.multi_reduction <maximumf>, %31, %cst_10 [2] : vector<2x8x8xf32> to vector<2x8xf32>
    %33 = vector.shape_cast %32 : vector<2x8xf32> to vector<2x8x1xf32>
    %34 = vector.broadcast %33 : vector<2x8x1xf32> to vector<2x8x8xf32>
    %35 = arith.subf %31, %34 : vector<2x8x8xf32>
    %36 = math.exp %35 : vector<2x8x8xf32>
    %cst_11 = arith.constant dense<0.000000e+00> : vector<2x8xf32>
    %37 = vector.multi_reduction <add>, %36, %cst_11 [2] : vector<2x8x8xf32> to vector<2x8xf32>
    %38 = vector.shape_cast %37 : vector<2x8xf32> to vector<2x8x1xf32>
    %39 = vector.broadcast %38 : vector<2x8x1xf32> to vector<2x8x8xf32>
    %40 = arith.divf %36, %39 : vector<2x8x8xf32>
    "tpu.trace_start"() <{level = 10 : i32, message = "bij,bje->bie"}> : () -> ()
    %cst_12 = arith.constant dense<0.000000e+00> : vector<2x8x8xf32>
    %41 = tpu.matmul %40, %28, %cst_12 {dimension_numbers = #tpu.dot_dimension_numbers<[2], [1], [1], [2], [0, 0, 0, 1, 1, 2], [0], [0]>} : vector<2x8x8xf32>, vector<2x8x8xf32>, vector<2x8x8xf32> -> vector<2x8x8xf32>
    "tpu.trace_stop"() : () -> ()
    %42 = vector.extract_strided_slice %3 {offsets = [0, 16], sizes = [16, 8], strides = [1, 1]} : vector<16x96xf32> to vector<16x8xf32>
    %43 = vector.shape_cast %42 : vector<16x8xf32> to vector<2x8x8xf32>
    %44 = vector.extract_strided_slice %3 {offsets = [0, 48], sizes = [16, 8], strides = [1, 1]} : vector<16x96xf32> to vector<16x8xf32>
    %45 = vector.shape_cast %44 : vector<16x8xf32> to vector<2x8x8xf32>
    %46 = vector.extract_strided_slice %3 {offsets = [0, 80], sizes = [16, 8], strides = [1, 1]} : vector<16x96xf32> to vector<16x8xf32>
    %47 = vector.shape_cast %46 : vector<16x8xf32> to vector<2x8x8xf32>
    "tpu.trace_start"() <{level = 10 : i32, message = "bie,bje->bij"}> : () -> ()
    %cst_13 = arith.constant dense<0.000000e+00> : vector<2x8x8xf32>
    %48 = tpu.matmul %43, %45, %cst_13 {dimension_numbers = #tpu.dot_dimension_numbers<[2], [2], [1], [1], [0, 0, 0, 1, 1, 1], [0], [0]>} : vector<2x8x8xf32>, vector<2x8x8xf32>, vector<2x8x8xf32> -> vector<2x8x8xf32>
    "tpu.trace_stop"() : () -> ()
    %cst_14 = arith.constant 0.353553385 : f32
    %49 = vector.broadcast %cst_14 : f32 to vector<2x8x8xf32>
    %50 = arith.mulf %48, %49 : vector<2x8x8xf32>
    %cst_15 = arith.constant dense<0xFF800000> : vector<2x8xf32>
    %51 = vector.multi_reduction <maximumf>, %50, %cst_15 [2] : vector<2x8x8xf32> to vector<2x8xf32>
    %52 = vector.shape_cast %51 : vector<2x8xf32> to vector<2x8x1xf32>
    %53 = vector.broadcast %52 : vector<2x8x1xf32> to vector<2x8x8xf32>
    %54 = arith.subf %50, %53 : vector<2x8x8xf32>
    %55 = math.exp %54 : vector<2x8x8xf32>
    %cst_16 = arith.constant dense<0.000000e+00> : vector<2x8xf32>
    %56 = vector.multi_reduction <add>, %55, %cst_16 [2] : vector<2x8x8xf32> to vector<2x8xf32>
    %57 = vector.shape_cast %56 : vector<2x8xf32> to vector<2x8x1xf32>
    %58 = vector.broadcast %57 : vector<2x8x1xf32> to vector<2x8x8xf32>
    %59 = arith.divf %55, %58 : vector<2x8x8xf32>
    "tpu.trace_start"() <{level = 10 : i32, message = "bij,bje->bie"}> : () -> ()
    %cst_17 = arith.constant dense<0.000000e+00> : vector<2x8x8xf32>
    %60 = tpu.matmul %59, %47, %cst_17 {dimension_numbers = #tpu.dot_dimension_numbers<[2], [1], [1], [2], [0, 0, 0, 1, 1, 2], [0], [0]>} : vector<2x8x8xf32>, vector<2x8x8xf32>, vector<2x8x8xf32> -> vector<2x8x8xf32>
    "tpu.trace_stop"() : () -> ()
    %61 = vector.extract_strided_slice %3 {offsets = [0, 24], sizes = [16, 8], strides = [1, 1]} : vector<16x96xf32> to vector<16x8xf32>
    %62 = vector.shape_cast %61 : vector<16x8xf32> to vector<2x8x8xf32>
    %63 = vector.extract_strided_slice %3 {offsets = [0, 56], sizes = [16, 8], strides = [1, 1]} : vector<16x96xf32> to vector<16x8xf32>
    %64 = vector.shape_cast %63 : vector<16x8xf32> to vector<2x8x8xf32>
    %65 = vector.extract_strided_slice %3 {offsets = [0, 88], sizes = [16, 8], strides = [1, 1]} : vector<16x96xf32> to vector<16x8xf32>
    %66 = vector.shape_cast %65 : vector<16x8xf32> to vector<2x8x8xf32>
    "tpu.trace_start"() <{level = 10 : i32, message = "bie,bje->bij"}> : () -> ()
    %cst_18 = arith.constant dense<0.000000e+00> : vector<2x8x8xf32>
    %67 = tpu.matmul %62, %64, %cst_18 {dimension_numbers = #tpu.dot_dimension_numbers<[2], [2], [1], [1], [0, 0, 0, 1, 1, 1], [0], [0]>} : vector<2x8x8xf32>, vector<2x8x8xf32>, vector<2x8x8xf32> -> vector<2x8x8xf32>
    "tpu.trace_stop"() : () -> ()
    %cst_19 = arith.constant 0.353553385 : f32
    %68 = vector.broadcast %cst_19 : f32 to vector<2x8x8xf32>
    %69 = arith.mulf %67, %68 : vector<2x8x8xf32>
    %cst_20 = arith.constant dense<0xFF800000> : vector<2x8xf32>
    %70 = vector.multi_reduction <maximumf>, %69, %cst_20 [2] : vector<2x8x8xf32> to vector<2x8xf32>
    %71 = vector.shape_cast %70 : vector<2x8xf32> to vector<2x8x1xf32>
    %72 = vector.broadcast %71 : vector<2x8x1xf32> to vector<2x8x8xf32>
    %73 = arith.subf %69, %72 : vector<2x8x8xf32>
    %74 = math.exp %73 : vector<2x8x8xf32>
    %cst_21 = arith.constant dense<0.000000e+00> : vector<2x8xf32>
    %75 = vector.multi_reduction <add>, %74, %cst_21 [2] : vector<2x8x8xf32> to vector<2x8xf32>
    %76 = vector.shape_cast %75 : vector<2x8xf32> to vector<2x8x1xf32>
    %77 = vector.broadcast %76 : vector<2x8x1xf32> to vector<2x8x8xf32>
    %78 = arith.divf %74, %77 : vector<2x8x8xf32>
    "tpu.trace_start"() <{level = 10 : i32, message = "bij,bje->bie"}> : () -> ()
    %cst_22 = arith.constant dense<0.000000e+00> : vector<2x8x8xf32>
    %79 = tpu.matmul %78, %66, %cst_22 {dimension_numbers = #tpu.dot_dimension_numbers<[2], [1], [1], [2], [0, 0, 0, 1, 1, 2], [0], [0]>} : vector<2x8x8xf32>, vector<2x8x8xf32>, vector<2x8x8xf32> -> vector<2x8x8xf32>
    "tpu.trace_stop"() : () -> ()
    %80 = tpu.concatenate %22, %41, %60, %79 in 2 : vector<2x8x8xf32>, vector<2x8x8xf32>, vector<2x8x8xf32>, vector<2x8x8xf32> -> vector<2x8x32xf32>
    %81 = vector.shape_cast %80 : vector<2x8x32xf32> to vector<16x32xf32>
    %82 = arith.truncf %81 : vector<16x32xf32> to vector<16x32xbf16>
    %c0_23 = arith.constant 0 : index
    %c0_24 = arith.constant 0 : index
    %83 = vector.load %arg2[%c0_23, %c0_24] : memref<32x32xbf16, #tpu.memory_space<vmem>>, vector<32x32xbf16>
    %cst_25 = arith.constant dense<0.000000e+00> : vector<16x32xf32>
    %84 = tpu.matmul %82, %83, %cst_25 {dimension_numbers = #tpu.dot_dimension_numbers<[1], [0], [0], [1], [0, 0, 1, 1], [], []>} : vector<16x32xbf16>, vector<32x32xbf16>, vector<16x32xf32> -> vector<16x32xf32>
    %c0_26 = arith.constant 0 : index
    %c0_27 = arith.constant 0 : index
    %85 = vector.load %arg3[%c0_26, %c0_27] : memref<1x32xf32, #tpu.memory_space<vmem>>, vector<1x32xf32>
    %86 = vector.broadcast %85 : vector<1x32xf32> to vector<16x32xf32>
    %87 = arith.addf %84, %86 : vector<16x32xf32>
    %c0_28 = arith.constant 0 : index
    %c0_29 = arith.constant 0 : index
    %88 = vector.load %arg4[%c0_28, %c0_29] : memref<16x32xf32, #tpu.memory_space<vmem>>, vector<16x32xf32>
    tpu.vector_store %arg4[%c0_28, %c0_29], %87 {strides = array<i32>} : memref<16x32xf32, #tpu.memory_space<vmem>>, vector<16x32xf32>,
    return
  }
}

</mosaic_0001>

<llo_original>
// kernel: tpu_custom_call.1
$region0: #{tpu_custom_call.1}
  #allocation0 [shape = 'u32[]', space=smem, size = 0x4, offset = 0x4, fixed_abs, tag = 'smem constant byte address 0x4 - core index']
  #allocation1 [shape = 'u32[144,128]{1,0:T(1,128)}', space=vmem, size = 0x12000, scoped, tag = 'internal scratch']
  %s0 = inlined_call_operand.hbm [shape: f32[16,32], index: 0, kind: input, shape index: {}]
  %s1 = inlined_call_operand.hbm [shape: bf16[32,96], index: 1, kind: input, shape index: {}]
  %s2 = inlined_call_operand.hbm [shape: bf16[32,32], index: 2, kind: input, shape index: {}]
  %s3 = inlined_call_operand.vmem [shape: f32[1,32], index: 3, kind: input, shape index: {}]
  %s4 = inlined_call_operand.hbm [shape: f32[16,32], index: 4, kind: output, shape index: {}]
  %s5 = sld [smem:[#allocation0]]
  $region38: #{tpu_custom_call.1} parent=0
    _
  %s7 = ssub.s32 1, %s5
  %s8 = scalar_select 0, %s7, %s5
  $region1: #{tpu_custom_call.1} parent=0
    #allocation2 [shape = 'u8[8192]{0}', space=vmem, size = 0x2000, scoped, tag = 'input window, operand 0, single buffered']
    #allocation3 [shape = 's32[1]{0}', space=sflag, size = 0x4, scoped, tag = 'scoped memory for tpu_custom_call.1']
    #allocation4 [shape = 's32[1]{0}', space=sflag, size = 0x4, scoped, tag = 'scoped memory for tpu_custom_call.1']
    #allocation5 [shape = 'u8[8192]{0}', space=vmem, size = 0x2000, scoped, tag = 'input window, operand 1, single buffered']
    #allocation6 [shape = 's32[1]{0}', space=sflag, size = 0x4, scoped, tag = 'scoped memory for tpu_custom_call.1']
    #allocation7 [shape = 'u8[8192]{0}', space=vmem, size = 0x2000, scoped, tag = 'input window, operand 2, single buffered']
    #allocation8 [shape = 'u8[8192]{0}', space=vmem, size = 0x2000, scoped, tag = 'output window, operand 0, single buffered']
    %9 = vsyncpa [#allocation3], 0
    %10 = vsyncpa [#allocation6], 0
    %11 = vsyncpa [#allocation4], 0
    // Predicated region
    $region2: #{tpu_custom_call.1} parent=1 // pred_check
      _
    $region3: #{tpu_custom_call.1} parent=1 // pred_check_branch
      %13 = sbr.rel (0) target = $region5
    $region4: #{tpu_custom_call.1} parent=1 // pred_region
      %s15 = ssub.s32 256, 256
      %16 = vsyncadd [#allocation3], %s15
      %s17 = sshll.u32 [#allocation2], 4
      %s18 = int_to_ptr.vmem [resolvable:$true] %s17
      %23 = dma.hbm_to_vmem [thread:$0]  %s0, 256, %s18, [#allocation3], 128, 128, 8
    $region5: #{tpu_custom_call.1} parent=1 // pred_fallthru
      _
    // Predicated region
    $region6: #{tpu_custom_call.1} parent=1 // pred_check
      _
    $region7: #{tpu_custom_call.1} parent=1 // pred_check_branch
      %25 = sbr.rel (0) target = $region9
    $region8: #{tpu_custom_call.1} parent=1 // pred_region
      %s27 = ssub.s32 256, 256
      %28 = vsyncadd [#allocation6], %s27
      %s29 = sshll.u32 [#allocation5], 4
      %s30 = int_to_ptr.vmem [resolvable:$true] %s29
      %35 = dma.hbm_to_vmem [thread:$0]  %s1, 256, %s30, [#allocation6], 64, 64, 4
    $region9: #{tpu_custom_call.1} parent=1 // pred_fallthru
      _
    // Predicated region
    $region10: #{tpu_custom_call.1} parent=1 // pred_check
      _
    $region11: #{tpu_custom_call.1} parent=1 // pred_check_branch
      %37 = sbr.rel (0) target = $region13
    $region12: #{tpu_custom_call.1} parent=1 // pred_region
      %s39 = ssub.s32 256, 256
      %40 = vsyncadd [#allocation6], %s39
      %s41 = sshll.u32 [#allocation7], 4
      %s42 = int_to_ptr.vmem [resolvable:$true] %s41
      %47 = dma.hbm_to_vmem [thread:$0]  %s2, 256, %s42, [#allocation6], 64, 64, 4
    $region13: #{tpu_custom_call.1} parent=1 // pred_fallthru
      _
    // Predicated region
    $region14: #{tpu_custom_call.1} parent=1 // pred_check
      _
    $region15: #{tpu_custom_call.1} parent=1 // pred_check_branch
      %49 = sbr.rel (0) target = $region17
    $region16: #{tpu_custom_call.1} parent=1 // pred_region
      _
    $region17: #{tpu_custom_call.1} parent=1 // pred_fallthru
      _
    // Predicated region
    $region18: #{tpu_custom_call.1} parent=1 // pred_check
      _
    $region19: #{tpu_custom_call.1} parent=1 // pred_check_branch
      %51 = sbr.rel (0) target = $region21
    $region20: #{tpu_custom_call.1} parent=1 // pred_region
      %52 = dma.done [#allocation3], 256
    $region21: #{tpu_custom_call.1} parent=1 // pred_fallthru
      _
    // Predicated region
    $region22: #{tpu_custom_call.1} parent=1 // pred_check
      _
    $region23: #{tpu_custom_call.1} parent=1 // pred_check_branch
      %54 = sbr.rel (0) target = $region25
    $region24: #{tpu_custom_call.1} parent=1 // pred_region
      %55 = dma.done [#allocation6], 256
    $region25: #{tpu_custom_call.1} parent=1 // pred_fallthru
      _
    // Predicated region
    $region26: #{tpu_custom_call.1} parent=1 // pred_check
      _
    $region27: #{tpu_custom_call.1} parent=1 // pred_check_branch
      %57 = sbr.rel (0) target = $region29
    $region28: #{tpu_custom_call.1} parent=1 // pred_region
      %58 = dma.done [#allocation6], 256
    $region29: #{tpu_custom_call.1} parent=1 // pred_fallthru
      _
    %v60 = vld [vmem:[#allocation2] sm:$0xff]
    %v61 = vld [vmem:[#allocation2 + $0x8] sm:$0xff]
    %v62 = vpack.c.bf16 %v61, %v60
    %v63 = vld [vmem:[#allocation5] sm:$0xf]
    %v64 = vld [vmem:[#allocation5 + $0x4] sm:$0xf]
    %v65 = vld [vmem:[#allocation5 + $0x8] sm:$0xf]
    %v66 = vld [vmem:[#allocation5 + $0xc] sm:$0xf]
    %v71 = vunpack.c.l.b16 %v63
    %v72 = vunpack.c.l.b16 %v64
    %v73 = vunpack.c.l.b16 %v65
    %v74 = vunpack.c.l.b16 %v66
    %v75 = vpack.c.b16 %v72, %v71
    %v76 = vpack.c.b16 %v74, %v73
    %vm79 = vcmask 261120
    %v81 = vsel %vm79, %v62, 0
    %83 = vmatprep.subr.bf16.mxu0 0
    %84 = vmatpush1.bf16.msra.mxu0 %v75
    %85 = vmatprep.subr.bf16.mxu0 0
    %86 = vmatpush1.bf16.msra.mxu0 %v76
    %87 = vmatprep.subr.bf16.mxu0 0
    %88 = vmatpush1.bf16.msra.mxu0 0
    %89 = vmatprep.subr.bf16.mxu0 0
    %90 = vmatpush1.bf16.msra.mxu0 0
    %91 = vmatprep.subr.bf16.mxu0 0
    %92 = vmatpush1.bf16.msra.mxu0 0
    %93 = vmatprep.subr.bf16.mxu0 0
    %94 = vmatpush1.bf16.msra.mxu0 0
    %95 = vmatprep.subr.bf16.mxu0 0
    %96 = vmatpush1.bf16.msra.mxu0 0
    %97 = vmatprep.subr.bf16.mxu0 0
    %98 = vmatpush1.bf16.msra.mxu0 0
    %99 = vmatprep.subr.bf16.mxu0 0
    %100 = vmatpush1.bf16.msra.mxu0 0
    %101 = vmatprep.subr.bf16.mxu0 0
    %102 = vmatpush1.bf16.msra.mxu0 0
    %103 = vmatprep.subr.bf16.mxu0 0
    %104 = vmatpush1.bf16.msra.mxu0 0
    %105 = vmatprep.subr.bf16.mxu0 0
    %106 = vmatpush1.bf16.msra.mxu0 0
    %107 = vmatprep.subr.bf16.mxu0 0
    %108 = vmatpush1.bf16.msra.mxu0 0
    %109 = vmatprep.subr.bf16.mxu0 0
    %110 = vmatpush1.bf16.msra.mxu0 0
    %111 = vmatprep.subr.bf16.mxu0 0
    %112 = vmatpush1.bf16.msra.mxu0 0
    %113 = vmatprep.subr.bf16.mxu0 0
    %114 = vmatpush1.bf16.msra.mxu0 0
    %115 = vmatprep.mubr.bf16.mxu0 0
    %116 = vmatmul.mubr.bf16.gmra.mrb[0].mxu0 %v81
    %v117 = vpop.f32.mrb[0].mxu0
    %v118 = vadd.f32 0.0, %v117
    %v119 = vpop.f32.mrb[0].mxu0
    %v120 = vpop.f32.mrb[0].mxu0
    %v121 = vadd.f32 0.0, %v120
    %v122 = vpop.f32.mrb[0].mxu0
    %123 = vdwg.mxu0
    %125 = vrot.lane.b32.xlu0 %v118, 96
    %v126 = vpop.permute.xlu0 %125
    %vm127 = vcmask 64512
    %v128 = vsel %vm127, %v118, 0
    %v130 = vsel %vm127, %v126, 0
    %132 = vmatprep.subr.mxu0 0.0
    %133 = vmatpush1.xpose.msra.mxu0 %v130
    %134 = vmatprep.subr.mxu0 0.0
    %135 = vmatpush1.xpose.msra.mxu0 0.0
    %136 = vmatprep.subr.mxu0 0.0
    %137 = vmatpush1.xpose.msra.mxu0 0.0
    %138 = vmatprep.subr.mxu0 0.0
    %139 = vmatpush1.xpose.msra.mxu0 0.0
    %140 = vmatprep.subr.mxu0 0.0
    %141 = vmatpush1.xpose.msra.mxu0 0.0
    %142 = vmatprep.subr.mxu0 0.0
    %143 = vmatpush1.xpose.msra.mxu0 0.0
    %144 = vmatprep.subr.mxu0 0.0
    %145 = vmatpush1.xpose.msra.mxu0 0.0
    %146 = vmatprep.subr.mxu0 0.0
    %147 = vmatpush1.xpose.msra.mxu0 0.0
    %148 = vmatprep.subr.mxu0 0.0
    %149 = vmatpush1.xpose.msra.mxu0 0.0
    %150 = vmatprep.subr.mxu0 0.0
    %151 = vmatpush1.xpose.msra.mxu0 0.0
    %152 = vmatprep.subr.mxu0 0.0
    %153 = vmatpush1.xpose.msra.mxu0 0.0
    %154 = vmatprep.subr.mxu0 0.0
    %155 = vmatpush1.xpose.msra.mxu0 0.0
    %156 = vmatprep.subr.mxu0 0.0
    %157 = vmatpush1.xpose.msra.mxu0 0.0
    %158 = vmatprep.subr.mxu0 0.0
    %159 = vmatpush1.xpose.msra.mxu0 0.0
    %160 = vmatprep.subr.mxu0 0.0
    %161 = vmatpush1.xpose.msra.mxu0 0.0
    %162 = vmatprep.subr.mxu0 0.0
    %163 = vmatpush1.xpose.msra.mxu0 0.0
    %164 = vmatprep.subr.mxu0 0.0
    %165 = vmatpush1.xpose.msra.mxu0 0.0
    %166 = vmatprep.subr.mxu0 0.0
    %167 = vmatpush1.xpose.msra.mxu0 0.0
    %168 = vmatprep.subr.mxu0 0.0
    %169 = vmatpush1.xpose.msra.mxu0 0.0
    %170 = vmatprep.subr.mxu0 0.0
    %171 = vmatpush1.xpose.msra.mxu0 0.0
    %172 = vmatprep.subr.mxu0 0.0
    %173 = vmatpush1.xpose.msra.mxu0 0.0
    %174 = vmatprep.subr.mxu0 0.0
    %175 = vmatpush1.xpose.msra.mxu0 0.0
    %176 = vmatprep.subr.mxu0 0.0
    %177 = vmatpush1.xpose.msra.mxu0 0.0
    %178 = vmatprep.subr.mxu0 0.0
    %179 = vmatpush1.xpose.msra.mxu0 0.0
    %180 = vmatprep.subr.mxu0 0.0
    %181 = vmatpush1.xpose.msra.mxu0 0.0
    %182 = vmatprep.subr.mxu0 0.0
    %183 = vmatpush1.xpose.msra.mxu0 0.0
    %184 = vmatprep.subr.mxu0 0.0
    %185 = vmatpush1.xpose.msra.mxu0 0.0
    %186 = vmatprep.subr.mxu0 0.0
    %187 = vmatpush1.xpose.msra.mxu0 0.0
    %188 = vmatprep.subr.mxu0 0.0
    %189 = vmatpush1.xpose.msra.mxu0 0.0
    %190 = vmatprep.subr.mxu0 0.0
    %191 = vmatpush1.xpose.msra.mxu0 0.0
    %192 = vmatprep.subr.mxu0 0.0
    %193 = vmatpush1.xpose.msra.mxu0 0.0
    %194 = vmatprep.subr.mxu0 0.0
    %195 = vmatpush1.xpose.msra.mxu0 0.0
    %196 = vmatprep.mubr.f32.mxu0 0.0
    %197 = vmatmul.mubr.f32.gmra.mrb[0].mxu0 %v128
    %v198 = vpop.f32.mrb[0].mxu0
    %v199 = vadd.f32 0.0, %v198
    %v200 = vpop.f32.mrb[0].mxu0
    %201 = vdwg.mxu0
    %203 = vrot.lane.b32.xlu0 %v121, 96
    %v204 = vpop.permute.xlu0 %203
    %v205 = vsel %vm127, %v121, 0
    %v207 = vsel %vm127, %v204, 0
    %209 = vmatprep.subr.mxu0 0.0
    %210 = vmatpush1.xpose.msra.mxu0 %v207
    %211 = vmatprep.subr.mxu0 0.0
    %212 = vmatpush1.xpose.msra.mxu0 0.0
    %213 = vmatprep.subr.mxu0 0.0
    %214 = vmatpush1.xpose.msra.mxu0 0.0
    %215 = vmatprep.subr.mxu0 0.0
    %216 = vmatpush1.xpose.msra.mxu0 0.0
    %217 = vmatprep.subr.mxu0 0.0
    %218 = vmatpush1.xpose.msra.mxu0 0.0
    %219 = vmatprep.subr.mxu0 0.0
    %220 = vmatpush1.xpose.msra.mxu0 0.0
    %221 = vmatprep.subr.mxu0 0.0
    %222 = vmatpush1.xpose.msra.mxu0 0.0
    %223 = vmatprep.subr.mxu0 0.0
    %224 = vmatpush1.xpose.msra.mxu0 0.0
    %225 = vmatprep.subr.mxu0 0.0
    %226 = vmatpush1.xpose.msra.mxu0 0.0
    %227 = vmatprep.subr.mxu0 0.0
    %228 = vmatpush1.xpose.msra.mxu0 0.0
    %229 = vmatprep.subr.mxu0 0.0
    %230 = vmatpush1.xpose.msra.mxu0 0.0
    %231 = vmatprep.subr.mxu0 0.0
    %232 = vmatpush1.xpose.msra.mxu0 0.0
    %233 = vmatprep.subr.mxu0 0.0
    %234 = vmatpush1.xpose.msra.mxu0 0.0
    %235 = vmatprep.subr.mxu0 0.0
    %236 = vmatpush1.xpose.msra.mxu0 0.0
    %237 = vmatprep.subr.mxu0 0.0
    %238 = vmatpush1.xpose.msra.mxu0 0.0
    %239 = vmatprep.subr.mxu0 0.0
    %240 = vmatpush1.xpose.msra.mxu0 0.0
    %241 = vmatprep.subr.mxu0 0.0
    %242 = vmatpush1.xpose.msra.mxu0 0.0
    %243 = vmatprep.subr.mxu0 0.0
    %244 = vmatpush1.xpose.msra.mxu0 0.0
    %245 = vmatprep.subr.mxu0 0.0
    %246 = vmatpush1.xpose.msra.mxu0 0.0
    %247 = vmatprep.subr.mxu0 0.0
    %248 = vmatpush1.xpose.msra.mxu0 0.0
    %249 = vmatprep.subr.mxu0 0.0
    %250 = vmatpush1.xpose.msra.mxu0 0.0
    %251 = vmatprep.subr.mxu0 0.0
    %252 = vmatpush1.xpose.msra.mxu0 0.0
    %253 = vmatprep.subr.mxu0 0.0
    %254 = vmatpush1.xpose.msra.mxu0 0.0
    %255 = vmatprep.subr.mxu0 0.0
    %256 = vmatpush1.xpose.msra.mxu0 0.0
    %257 = vmatprep.subr.mxu0 0.0
    %258 = vmatpush1.xpose.msra.mxu0 0.0
    %259 = vmatprep.subr.mxu0 0.0
    %260 = vmatpush1.xpose.msra.mxu0 0.0
    %261 = vmatprep.subr.mxu0 0.0
    %262 = vmatpush1.xpose.msra.mxu0 0.0
    %263 = vmatprep.subr.mxu0 0.0
    %264 = vmatpush1.xpose.msra.mxu0 0.0
    %265 = vmatprep.subr.mxu0 0.0
    %266 = vmatpush1.xpose.msra.mxu0 0.0
    %267 = vmatprep.subr.mxu0 0.0
    %268 = vmatpush1.xpose.msra.mxu0 0.0
    %269 = vmatprep.subr.mxu0 0.0
    %270 = vmatpush1.xpose.msra.mxu0 0.0
    %271 = vmatprep.subr.mxu0 0.0
    %272 = vmatpush1.xpose.msra.mxu0 0.0
    %273 = vmatprep.mubr.f32.mxu0 0.0
    %274 = vmatmul.mubr.f32.gmra.mrb[0].mxu0 %v205
    %v275 = vpop.f32.mrb[0].mxu0
    %v276 = vadd.f32 0.0, %v275
    %v277 = vpop.f32.mrb[0].mxu0
    %278 = vdwg.mxu0
    %v279 = vmul.f32 %v199, 0.35355338
    %v280 = vmul.f32 %v276, 0.35355338
    %v281 = vsel %vm127, %v279, -inf
    %282 = vmax.xlane.f32.xlu0 %v281
    %v283 = vpop.xlane.xlu0 %282
    %v284 = vsel %vm127, %v280, -inf
    %285 = vmax.xlane.f32.xlu0 %v284
    %v286 = vpop.xlane.xlu0 %285
    %v287 = vsub.f32 %v279, %v283
    %v288 = vsub.f32 %v280, %v286
    %v289 = vmul.f32 %v287, 1.442695
    %v290 = vpow.pop %v289
    %v291 = vmul.f32 %v288, 1.442695
    %v292 = vpow.pop %v291
    %v293 = vsel %vm127, %v290, 0.0
    %294 = vadd.xlane.f32.xlu0 %v293
    %v295 = vpop.xlane.xlu0 %294
    %v296 = vsel %vm127, %v292, 0.0
    %297 = vadd.xlane.f32.xlu0 %v296
    %v298 = vpop.xlane.xlu0 %297
    %v299 = vrcp.pop %v295
    %v300 = vmul.f32 %v290, %v299
    %v301 = vrcp.pop %v298
    %v302 = vmul.f32 %v292, %v301
    %303 = vrot.lane.b32.xlu0 %v118, 64
    %v304 = vpop.permute.xlu0 %303
    %v307 = vsel %vm127, %v300, 0
    %309 = vmatprep.subr.mxu0 0.0
    %310 = vmatpush1.msra.mxu0 %v304
    %311 = vmatprep.subr.mxu0 0.0
    %312 = vmatpush1.msra.mxu0 0.0
    %313 = vmatprep.subr.mxu0 0.0
    %314 = vmatpush1.msra.mxu0 0.0
    %315 = vmatprep.subr.mxu0 0.0
    %316 = vmatpush1.msra.mxu0 0.0
    %317 = vmatprep.subr.mxu0 0.0
    %318 = vmatpush1.msra.mxu0 0.0
    %319 = vmatprep.subr.mxu0 0.0
    %320 = vmatpush1.msra.mxu0 0.0
    %321 = vmatprep.subr.mxu0 0.0
    %322 = vmatpush1.msra.mxu0 0.0
    %323 = vmatprep.subr.mxu0 0.0
    %324 = vmatpush1.msra.mxu0 0.0
    %325 = vmatprep.subr.mxu0 0.0
    %326 = vmatpush1.msra.mxu0 0.0
    %327 = vmatprep.subr.mxu0 0.0
    %328 = vmatpush1.msra.mxu0 0.0
    %329 = vmatprep.subr.mxu0 0.0
    %330 = vmatpush1.msra.mxu0 0.0
    %331 = vmatprep.subr.mxu0 0.0
    %332 = vmatpush1.msra.mxu0 0.0
    %333 = vmatprep.subr.mxu0 0.0
    %334 = vmatpush1.msra.mxu0 0.0
    %335 = vmatprep.subr.mxu0 0.0
    %336 = vmatpush1.msra.mxu0 0.0
    %337 = vmatprep.subr.mxu0 0.0
    %338 = vmatpush1.msra.mxu0 0.0
    %339 = vmatprep.subr.mxu0 0.0
    %340 = vmatpush1.msra.mxu0 0.0
    %341 = vmatprep.subr.mxu0 0.0
    %342 = vmatpush1.msra.mxu0 0.0
    %343 = vmatprep.subr.mxu0 0.0
    %344 = vmatpush1.msra.mxu0 0.0
    %345 = vmatprep.subr.mxu0 0.0
    %346 = vmatpush1.msra.mxu0 0.0
    %347 = vmatprep.subr.mxu0 0.0
    %348 = vmatpush1.msra.mxu0 0.0
    %349 = vmatprep.subr.mxu0 0.0
    %350 = vmatpush1.msra.mxu0 0.0
    %351 = vmatprep.subr.mxu0 0.0
    %352 = vmatpush1.msra.mxu0 0.0
    %353 = vmatprep.subr.mxu0 0.0
    %354 = vmatpush1.msra.mxu0 0.0
    %355 = vmatprep.subr.mxu0 0.0
    %356 = vmatpush1.msra.mxu0 0.0
    %357 = vmatprep.subr.mxu0 0.0
    %358 = vmatpush1.msra.mxu0 0.0
    %359 = vmatprep.subr.mxu0 0.0
    %360 = vmatpush1.msra.mxu0 0.0
    %361 = vmatprep.subr.mxu0 0.0
    %362 = vmatpush1.msra.mxu0 0.0
    %363 = vmatprep.subr.mxu0 0.0
    %364 = vmatpush1.msra.mxu0 0.0
    %365 = vmatprep.subr.mxu0 0.0
    %366 = vmatpush1.msra.mxu0 0.0
    %367 = vmatprep.subr.mxu0 0.0
    %368 = vmatpush1.msra.mxu0 0.0
    %369 = vmatprep.subr.mxu0 0.0
    %370 = vmatpush1.msra.mxu0 0.0
    %371 = vmatprep.subr.mxu0 0.0
    %372 = vmatpush1.msra.mxu0 0.0
    %373 = vmatprep.mubr.f32.mxu0 0.0
    %374 = vmatmul.mubr.f32.gmra.mrb[0].mxu0 %v307
    %v375 = vpop.f32.mrb[0].mxu0
    %v376 = vadd.f32 0.0, %v375
    %v377 = vpop.f32.mrb[0].mxu0
    %378 = vdwg.mxu0
    %379 = vrot.lane.b32.xlu0 %v121, 64
    %v380 = vpop.permute.xlu0 %379
    %v383 = vsel %vm127, %v302, 0
    %385 = vmatprep.subr.mxu0 0.0
    %386 = vmatpush1.msra.mxu0 %v380
    %387 = vmatprep.subr.mxu0 0.0
    %388 = vmatpush1.msra.mxu0 0.0
    %389 = vmatprep.subr.mxu0 0.0
    %390 = vmatpush1.msra.mxu0 0.0
    %391 = vmatprep.subr.mxu0 0.0
    %392 = vmatpush1.msra.mxu0 0.0
    %393 = vmatprep.subr.mxu0 0.0
    %394 = vmatpush1.msra.mxu0 0.0
    %395 = vmatprep.subr.mxu0 0.0
    %396 = vmatpush1.msra.mxu0 0.0
    %397 = vmatprep.subr.mxu0 0.0
    %398 = vmatpush1.msra.mxu0 0.0
    %399 = vmatprep.subr.mxu0 0.0
    %400 = vmatpush1.msra.mxu0 0.0
    %401 = vmatprep.subr.mxu0 0.0
    %402 = vmatpush1.msra.mxu0 0.0
    %403 = vmatprep.subr.mxu0 0.0
    %404 = vmatpush1.msra.mxu0 0.0
    %405 = vmatprep.subr.mxu0 0.0
    %406 = vmatpush1.msra.mxu0 0.0
    %407 = vmatprep.subr.mxu0 0.0
    %408 = vmatpush1.msra.mxu0 0.0
    %409 = vmatprep.subr.mxu0 0.0
    %410 = vmatpush1.msra.mxu0 0.0
    %411 = vmatprep.subr.mxu0 0.0
    %412 = vmatpush1.msra.mxu0 0.0
    %413 = vmatprep.subr.mxu0 0.0
    %414 = vmatpush1.msra.mxu0 0.0
    %415 = vmatprep.subr.mxu0 0.0
    %416 = vmatpush1.msra.mxu0 0.0
    %417 = vmatprep.subr.mxu0 0.0
    %418 = vmatpush1.msra.mxu0 0.0
    %419 = vmatprep.subr.mxu0 0.0
    %420 = vmatpush1.msra.mxu0 0.0
    %421 = vmatprep.subr.mxu0 0.0
    %422 = vmatpush1.msra.mxu0 0.0
    %423 = vmatprep.subr.mxu0 0.0
    %424 = vmatpush1.msra.mxu0 0.0
    %425 = vmatprep.subr.mxu0 0.0
    %426 = vmatpush1.msra.mxu0 0.0
    %427 = vmatprep.subr.mxu0 0.0
    %428 = vmatpush1.msra.mxu0 0.0
    %429 = vmatprep.subr.mxu0 0.0
    %430 = vmatpush1.msra.mxu0 0.0
    %431 = vmatprep.subr.mxu0 0.0
    %432 = vmatpush1.msra.mxu0 0.0
    %433 = vmatprep.subr.mxu0 0.0
    %434 = vmatpush1.msra.mxu0 0.0
    %435 = vmatprep.subr.mxu0 0.0
    %436 = vmatpush1.msra.mxu0 0.0
    %437 = vmatprep.subr.mxu0 0.0
    %438 = vmatpush1.msra.mxu0 0.0
    %439 = vmatprep.subr.mxu0 0.0
    %440 = vmatpush1.msra.mxu0 0.0
    %441 = vmatprep.subr.mxu0 0.0
    %442 = vmatpush1.msra.mxu0 0.0
    %443 = vmatprep.subr.mxu0 0.0
    %444 = vmatpush1.msra.mxu0 0.0
    %445 = vmatprep.subr.mxu0 0.0
    %446 = vmatpush1.msra.mxu0 0.0
    %447 = vmatprep.subr.mxu0 0.0
    %448 = vmatpush1.msra.mxu0 0.0
    %449 = vmatprep.mubr.f32.mxu0 0.0
    %450 = vmatmul.mubr.f32.gmra.mrb[0].mxu0 %v383
    %v451 = vpop.f32.mrb[0].mxu0
    %v452 = vadd.f32 0.0, %v451
    %v453 = vpop.f32.mrb[0].mxu0
    %454 = vdwg.mxu0
    %455 = vrot.lane.b32.xlu0 %v118, 120
    %v456 = vpop.permute.xlu0 %455
    %457 = vrot.lane.b32.xlu0 %v118, 88
    %v458 = vpop.permute.xlu0 %457
    %v459 = vsel %vm127, %v456, 0
    %v461 = vsel %vm127, %v458, 0
    %463 = vmatprep.subr.mxu0 0.0
    %464 = vmatpush1.xpose.msra.mxu0 %v461
    %465 = vmatprep.subr.mxu0 0.0
    %466 = vmatpush1.xpose.msra.mxu0 0.0
    %467 = vmatprep.subr.mxu0 0.0
    %468 = vmatpush1.xpose.msra.mxu0 0.0
    %469 = vmatprep.subr.mxu0 0.0
    %470 = vmatpush1.xpose.msra.mxu0 0.0
    %471 = vmatprep.subr.mxu0 0.0
    %472 = vmatpush1.xpose.msra.mxu0 0.0
    %473 = vmatprep.subr.mxu0 0.0
    %474 = vmatpush1.xpose.msra.mxu0 0.0
    %475 = vmatprep.subr.mxu0 0.0
    %476 = vmatpush1.xpose.msra.mxu0 0.0
    %477 = vmatprep.subr.mxu0 0.0
    %478 = vmatpush1.xpose.msra.mxu0 0.0
    %479 = vmatprep.subr.mxu0 0.0
    %480 = vmatpush1.xpose.msra.mxu0 0.0
    %481 = vmatprep.subr.mxu0 0.0
    %482 = vmatpush1.xpose.msra.mxu0 0.0
    %483 = vmatprep.subr.mxu0 0.0
    %484 = vmatpush1.xpose.msra.mxu0 0.0
    %485 = vmatprep.subr.mxu0 0.0
    %486 = vmatpush1.xpose.msra.mxu0 0.0
    %487 = vmatprep.subr.mxu0 0.0
    %488 = vmatpush1.xpose.msra.mxu0 0.0
    %489 = vmatprep.subr.mxu0 0.0
    %490 = vmatpush1.xpose.msra.mxu0 0.0
    %491 = vmatprep.subr.mxu0 0.0
    %492 = vmatpush1.xpose.msra.mxu0 0.0
    %493 = vmatprep.subr.mxu0 0.0
    %494 = vmatpush1.xpose.msra.mxu0 0.0
    %495 = vmatprep.subr.mxu0 0.0
    %496 = vmatpush1.xpose.msra.mxu0 0.0
    %497 = vmatprep.subr.mxu0 0.0
    %498 = vmatpush1.xpose.msra.mxu0 0.0
    %499 = vmatprep.subr.mxu0 0.0
    %500 = vmatpush1.xpose.msra.mxu0 0.0
    %501 = vmatprep.subr.mxu0 0.0
    %502 = vmatpush1.xpose.msra.mxu0 0.0
    %503 = vmatprep.subr.mxu0 0.0
    %504 = vmatpush1.xpose.msra.mxu0 0.0
    %505 = vmatprep.subr.mxu0 0.0
    %506 = vmatpush1.xpose.msra.mxu0 0.0
    %507 = vmatprep.subr.mxu0 0.0
    %508 = vmatpush1.xpose.msra.mxu0 0.0
    %509 = vmatprep.subr.mxu0 0.0
    %510 = vmatpush1.xpose.msra.mxu0 0.0
    %511 = vmatprep.subr.mxu0 0.0
    %512 = vmatpush1.xpose.msra.mxu0 0.0
    %513 = vmatprep.subr.mxu0 0.0
    %514 = vmatpush1.xpose.msra.mxu0 0.0
    %515 = vmatprep.subr.mxu0 0.0
    %516 = vmatpush1.xpose.msra.mxu0 0.0
    %517 = vmatprep.subr.mxu0 0.0
    %518 = vmatpush1.xpose.msra.mxu0 0.0
    %519 = vmatprep.subr.mxu0 0.0
    %520 = vmatpush1.xpose.msra.mxu0 0.0
    %521 = vmatprep.subr.mxu0 0.0
    %522 = vmatpush1.xpose.msra.mxu0 0.0
    %523 = vmatprep.subr.mxu0 0.0
    %524 = vmatpush1.xpose.msra.mxu0 0.0
    %525 = vmatprep.subr.mxu0 0.0
    %526 = vmatpush1.xpose.msra.mxu0 0.0
    %527 = vmatprep.mubr.f32.mxu0 0.0
    %528 = vmatmul.mubr.f32.gmra.mrb[0].mxu0 %v459
    %v529 = vpop.f32.mrb[0].mxu0
    %v530 = vadd.f32 0.0, %v529
    %v531 = vpop.f32.mrb[0].mxu0
    %532 = vdwg.mxu0
    %533 = vrot.lane.b32.xlu0 %v121, 120
    %v534 = vpop.permute.xlu0 %533
    %535 = vrot.lane.b32.xlu0 %v121, 88
    %v536 = vpop.permute.xlu0 %535
    %v537 = vsel %vm127, %v534, 0
    %v539 = vsel %vm127, %v536, 0
    %541 = vmatprep.subr.mxu0 0.0
    %542 = vmatpush1.xpose.msra.mxu0 %v539
    %543 = vmatprep.subr.mxu0 0.0
    %544 = vmatpush1.xpose.msra.mxu0 0.0
    %545 = vmatprep.subr.mxu0 0.0
    %546 = vmatpush1.xpose.msra.mxu0 0.0
    %547 = vmatprep.subr.mxu0 0.0
    %548 = vmatpush1.xpose.msra.mxu0 0.0
    %549 = vmatprep.subr.mxu0 0.0
    %550 = vmatpush1.xpose.msra.mxu0 0.0
    %551 = vmatprep.subr.mxu0 0.0
    %552 = vmatpush1.xpose.msra.mxu0 0.0
    %553 = vmatprep.subr.mxu0 0.0
    %554 = vmatpush1.xpose.msra.mxu0 0.0
    %555 = vmatprep.subr.mxu0 0.0
    %556 = vmatpush1.xpose.msra.mxu0 0.0
    %557 = vmatprep.subr.mxu0 0.0
    %558 = vmatpush1.xpose.msra.mxu0 0.0
    %559 = vmatprep.subr.mxu0 0.0
    %560 = vmatpush1.xpose.msra.mxu0 0.0
    %561 = vmatprep.subr.mxu0 0.0
    %562 = vmatpush1.xpose.msra.mxu0 0.0
    %563 = vmatprep.subr.mxu0 0.0
    %564 = vmatpush1.xpose.msra.mxu0 0.0
    %565 = vmatprep.subr.mxu0 0.0
    %566 = vmatpush1.xpose.msra.mxu0 0.0
    %567 = vmatprep.subr.mxu0 0.0
    %568 = vmatpush1.xpose.msra.mxu0 0.0
    %569 = vmatprep.subr.mxu0 0.0
    %570 = vmatpush1.xpose.msra.mxu0 0.0
    %571 = vmatprep.subr.mxu0 0.0
    %572 = vmatpush1.xpose.msra.mxu0 0.0
    %573 = vmatprep.subr.mxu0 0.0
    %574 = vmatpush1.xpose.msra.mxu0 0.0
    %575 = vmatprep.subr.mxu0 0.0
    %576 = vmatpush1.xpose.msra.mxu0 0.0
    %577 = vmatprep.subr.mxu0 0.0
    %578 = vmatpush1.xpose.msra.mxu0 0.0
    %579 = vmatprep.subr.mxu0 0.0
    %580 = vmatpush1.xpose.msra.mxu0 0.0
    %581 = vmatprep.subr.mxu0 0.0
    %582 = vmatpush1.xpose.msra.mxu0 0.0
    %583 = vmatprep.subr.mxu0 0.0
    %584 = vmatpush1.xpose.msra.mxu0 0.0
    %585 = vmatprep.subr.mxu0 0.0
    %586 = vmatpush1.xpose.msra.mxu0 0.0
    %587 = vmatprep.subr.mxu0 0.0
    %588 = vmatpush1.xpose.msra.mxu0 0.0
    %589 = vmatprep.subr.mxu0 0.0
    %590 = vmatpush1.xpose.msra.mxu0 0.0
    %591 = vmatprep.subr.mxu0 0.0
    %592 = vmatpush1.xpose.msra.mxu0 0.0
    %593 = vmatprep.subr.mxu0 0.0
    %594 = vmatpush1.xpose.msra.mxu0 0.0
    %595 = vmatprep.subr.mxu0 0.0
    %596 = vmatpush1.xpose.msra.mxu0 0.0
    %597 = vmatprep.subr.mxu0 0.0
    %598 = vmatpush1.xpose.msra.mxu0 0.0
    %599 = vmatprep.subr.mxu0 0.0
    %600 = vmatpush1.xpose.msra.mxu0 0.0
    %601 = vmatprep.subr.mxu0 0.0
    %602 = vmatpush1.xpose.msra.mxu0 0.0
    %603 = vmatprep.subr.mxu0 0.0
    %604 = vmatpush1.xpose.msra.mxu0 0.0
    %605 = vmatprep.mubr.f32.mxu0 0.0
    %606 = vmatmul.mubr.f32.gmra.mrb[0].mxu0 %v537
    %v607 = vpop.f32.mrb[0].mxu0
    %v608 = vadd.f32 0.0, %v607
    %v609 = vpop.f32.mrb[0].mxu0
    %610 = vdwg.mxu0
    %v611 = vmul.f32 %v530, 0.35355338
    %v612 = vmul.f32 %v608, 0.35355338
    %v613 = vsel %vm127, %v611, -inf
    %614 = vmax.xlane.f32.xlu0 %v613
    %v615 = vpop.xlane.xlu0 %614
    %v616 = vsel %vm127, %v612, -inf
    %617 = vmax.xlane.f32.xlu0 %v616
    %v618 = vpop.xlane.xlu0 %617
    %v619 = vsub.f32 %v611, %v615
    %v620 = vsub.f32 %v612, %v618
    %v621 = vmul.f32 %v619, 1.442695
    %v622 = vpow.pop %v621
    %v623 = vmul.f32 %v620, 1.442695
    %v624 = vpow.pop %v623
    %v625 = vsel %vm127, %v622, 0.0
    %626 = vadd.xlane.f32.xlu0 %v625
    %v627 = vpop.xlane.xlu0 %626
    %v628 = vsel %vm127, %v624, 0.0
    %629 = vadd.xlane.f32.xlu0 %v628
    %v630 = vpop.xlane.xlu0 %629
    %v631 = vrcp.pop %v627
    %v632 = vmul.f32 %v622, %v631
    %v633 = vrcp.pop %v630
    %v634 = vmul.f32 %v624, %v633
    %635 = vrot.lane.b32.xlu0 %v118, 56
    %v636 = vpop.permute.xlu0 %635
    %v639 = vsel %vm127, %v632, 0
    %641 = vmatprep.subr.mxu0 0.0
    %642 = vmatpush1.msra.mxu0 %v636
    %643 = vmatprep.subr.mxu0 0.0
    %644 = vmatpush1.msra.mxu0 0.0
    %645 = vmatprep.subr.mxu0 0.0
    %646 = vmatpush1.msra.mxu0 0.0
    %647 = vmatprep.subr.mxu0 0.0
    %648 = vmatpush1.msra.mxu0 0.0
    %649 = vmatprep.subr.mxu0 0.0
    %650 = vmatpush1.msra.mxu0 0.0
    %651 = vmatprep.subr.mxu0 0.0
    %652 = vmatpush1.msra.mxu0 0.0
    %653 = vmatprep.subr.mxu0 0.0
    %654 = vmatpush1.msra.mxu0 0.0
    %655 = vmatprep.subr.mxu0 0.0
    %656 = vmatpush1.msra.mxu0 0.0
    %657 = vmatprep.subr.mxu0 0.0
    %658 = vmatpush1.msra.mxu0 0.0
    %659 = vmatprep.subr.mxu0 0.0
    %660 = vmatpush1.msra.mxu0 0.0
    %661 = vmatprep.subr.mxu0 0.0
    %662 = vmatpush1.msra.mxu0 0.0
    %663 = vmatprep.subr.mxu0 0.0
    %664 = vmatpush1.msra.mxu0 0.0
    %665 = vmatprep.subr.mxu0 0.0
    %666 = vmatpush1.msra.mxu0 0.0
    %667 = vmatprep.subr.mxu0 0.0
    %668 = vmatpush1.msra.mxu0 0.0
    %669 = vmatprep.subr.mxu0 0.0
    %670 = vmatpush1.msra.mxu0 0.0
    %671 = vmatprep.subr.mxu0 0.0
    %672 = vmatpush1.msra.mxu0 0.0
    %673 = vmatprep.subr.mxu0 0.0
    %674 = vmatpush1.msra.mxu0 0.0
    %675 = vmatprep.subr.mxu0 0.0
    %676 = vmatpush1.msra.mxu0 0.0
    %677 = vmatprep.subr.mxu0 0.0
    %678 = vmatpush1.msra.mxu0 0.0
    %679 = vmatprep.subr.mxu0 0.0
    %680 = vmatpush1.msra.mxu0 0.0
    %681 = vmatprep.subr.mxu0 0.0
    %682 = vmatpush1.msra.mxu0 0.0
    %683 = vmatprep.subr.mxu0 0.0
    %684 = vmatpush1.msra.mxu0 0.0
    %685 = vmatprep.subr.mxu0 0.0
    %686 = vmatpush1.msra.mxu0 0.0
    %687 = vmatprep.subr.mxu0 0.0
    %688 = vmatpush1.msra.mxu0 0.0
    %689 = vmatprep.subr.mxu0 0.0
    %690 = vmatpush1.msra.mxu0 0.0
    %691 = vmatprep.subr.mxu0 0.0
    %692 = vmatpush1.msra.mxu0 0.0
    %693 = vmatprep.subr.mxu0 0.0
    %694 = vmatpush1.msra.mxu0 0.0
    %695 = vmatprep.subr.mxu0 0.0
    %696 = vmatpush1.msra.mxu0 0.0
    %697 = vmatprep.subr.mxu0 0.0
    %698 = vmatpush1.msra.mxu0 0.0
    %699 = vmatprep.subr.mxu0 0.0
    %700 = vmatpush1.msra.mxu0 0.0
    %701 = vmatprep.subr.mxu0 0.0
    %702 = vmatpush1.msra.mxu0 0.0
    %703 = vmatprep.subr.mxu0 0.0
    %704 = vmatpush1.msra.mxu0 0.0
    %705 = vmatprep.mubr.f32.mxu0 0.0
    %706 = vmatmul.mubr.f32.gmra.mrb[0].mxu0 %v639
    %v707 = vpop.f32.mrb[0].mxu0
    %v708 = vadd.f32 0.0, %v707
    %v709 = vpop.f32.mrb[0].mxu0
    %710 = vdwg.mxu0
    %711 = vrot.lane.b32.xlu0 %v121, 56
    %v712 = vpop.permute.xlu0 %711
    %v715 = vsel %vm127, %v634, 0
    %717 = vmatprep.subr.mxu0 0.0
    %718 = vmatpush1.msra.mxu0 %v712
    %719 = vmatprep.subr.mxu0 0.0
    %720 = vmatpush1.msra.mxu0 0.0
    %721 = vmatprep.subr.mxu0 0.0
    %722 = vmatpush1.msra.mxu0 0.0
    %723 = vmatprep.subr.mxu0 0.0
    %724 = vmatpush1.msra.mxu0 0.0
    %725 = vmatprep.subr.mxu0 0.0
    %726 = vmatpush1.msra.mxu0 0.0
    %727 = vmatprep.subr.mxu0 0.0
    %728 = vmatpush1.msra.mxu0 0.0
    %729 = vmatprep.subr.mxu0 0.0
    %730 = vmatpush1.msra.mxu0 0.0
    %731 = vmatprep.subr.mxu0 0.0
    %732 = vmatpush1.msra.mxu0 0.0
    %733 = vmatprep.subr.mxu0 0.0
    %734 = vmatpush1.msra.mxu0 0.0
    %735 = vmatprep.subr.mxu0 0.0
    %736 = vmatpush1.msra.mxu0 0.0
    %737 = vmatprep.subr.mxu0 0.0
    %738 = vmatpush1.msra.mxu0 0.0
    %739 = vmatprep.subr.mxu0 0.0
    %740 = vmatpush1.msra.mxu0 0.0
    %741 = vmatprep.subr.mxu0 0.0
    %742 = vmatpush1.msra.mxu0 0.0
    %743 = vmatprep.subr.mxu0 0.0
    %744 = vmatpush1.msra.mxu0 0.0
    %745 = vmatprep.subr.mxu0 0.0
    %746 = vmatpush1.msra.mxu0 0.0
    %747 = vmatprep.subr.mxu0 0.0
    %748 = vmatpush1.msra.mxu0 0.0
    %749 = vmatprep.subr.mxu0 0.0
    %750 = vmatpush1.msra.mxu0 0.0
    %751 = vmatprep.subr.mxu0 0.0
    %752 = vmatpush1.msra.mxu0 0.0
    %753 = vmatprep.subr.mxu0 0.0
    %754 = vmatpush1.msra.mxu0 0.0
    %755 = vmatprep.subr.mxu0 0.0
    %756 = vmatpush1.msra.mxu0 0.0
    %757 = vmatprep.subr.mxu0 0.0
    %758 = vmatpush1.msra.mxu0 0.0
    %759 = vmatprep.subr.mxu0 0.0
    %760 = vmatpush1.msra.mxu0 0.0
    %761 = vmatprep.subr.mxu0 0.0
    %762 = vmatpush1.msra.mxu0 0.0
    %763 = vmatprep.subr.mxu0 0.0
    %764 = vmatpush1.msra.mxu0 0.0
    %765 = vmatprep.subr.mxu0 0.0
    %766 = vmatpush1.msra.mxu0 0.0
    %767 = vmatprep.subr.mxu0 0.0
    %768 = vmatpush1.msra.mxu0 0.0
    %769 = vmatprep.subr.mxu0 0.0
    %770 = vmatpush1.msra.mxu0 0.0
    %771 = vmatprep.subr.mxu0 0.0
    %772 = vmatpush1.msra.mxu0 0.0
    %773 = vmatprep.subr.mxu0 0.0
    %774 = vmatpush1.msra.mxu0 0.0
    %775 = vmatprep.subr.mxu0 0.0
    %776 = vmatpush1.msra.mxu0 0.0
    %777 = vmatprep.subr.mxu0 0.0
    %778 = vmatpush1.msra.mxu0 0.0
    %779 = vmatprep.subr.mxu0 0.0
    %780 = vmatpush1.msra.mxu0 0.0
    %781 = vmatprep.mubr.f32.mxu0 0.0
    %782 = vmatmul.mubr.f32.gmra.mrb[0].mxu0 %v715
    %v783 = vpop.f32.mrb[0].mxu0
    %v784 = vadd.f32 0.0, %v783
    %v785 = vpop.f32.mrb[0].mxu0
    %786 = vdwg.mxu0
    %787 = vrot.lane.b32.xlu0 %v118, 112
    %v788 = vpop.permute.xlu0 %787
    %789 = vrot.lane.b32.xlu0 %v118, 80
    %v790 = vpop.permute.xlu0 %789
    %v791 = vsel %vm127, %v788, 0
    %v793 = vsel %vm127, %v790, 0
    %795 = vmatprep.subr.mxu0 0.0
    %796 = vmatpush1.xpose.msra.mxu0 %v793
    %797 = vmatprep.subr.mxu0 0.0
    %798 = vmatpush1.xpose.msra.mxu0 0.0
    %799 = vmatprep.subr.mxu0 0.0
    %800 = vmatpush1.xpose.msra.mxu0 0.0
    %801 = vmatprep.subr.mxu0 0.0
    %802 = vmatpush1.xpose.msra.mxu0 0.0
    %803 = vmatprep.subr.mxu0 0.0
    %804 = vmatpush1.xpose.msra.mxu0 0.0
    %805 = vmatprep.subr.mxu0 0.0
    %806 = vmatpush1.xpose.msra.mxu0 0.0
    %807 = vmatprep.subr.mxu0 0.0
    %808 = vmatpush1.xpose.msra.mxu0 0.0
    %809 = vmatprep.subr.mxu0 0.0
    %810 = vmatpush1.xpose.msra.mxu0 0.0
    %811 = vmatprep.subr.mxu0 0.0
    %812 = vmatpush1.xpose.msra.mxu0 0.0
    %813 = vmatprep.subr.mxu0 0.0
    %814 = vmatpush1.xpose.msra.mxu0 0.0
    %815 = vmatprep.subr.mxu0 0.0
    %816 = vmatpush1.xpose.msra.mxu0 0.0
    %817 = vmatprep.subr.mxu0 0.0
    %818 = vmatpush1.xpose.msra.mxu0 0.0
    %819 = vmatprep.subr.mxu0 0.0
    %820 = vmatpush1.xpose.msra.mxu0 0.0
    %821 = vmatprep.subr.mxu0 0.0
    %822 = vmatpush1.xpose.msra.mxu0 0.0
    %823 = vmatprep.subr.mxu0 0.0
    %824 = vmatpush1.xpose.msra.mxu0 0.0
    %825 = vmatprep.subr.mxu0 0.0
    %826 = vmatpush1.xpose.msra.mxu0 0.0
    %827 = vmatprep.subr.mxu0 0.0
    %828 = vmatpush1.xpose.msra.mxu0 0.0
    %829 = vmatprep.subr.mxu0 0.0
    %830 = vmatpush1.xpose.msra.mxu0 0.0
    %831 = vmatprep.subr.mxu0 0.0
    %832 = vmatpush1.xpose.msra.mxu0 0.0
    %833 = vmatprep.subr.mxu0 0.0
    %834 = vmatpush1.xpose.msra.mxu0 0.0
    %835 = vmatprep.subr.mxu0 0.0
    %836 = vmatpush1.xpose.msra.mxu0 0.0
    %837 = vmatprep.subr.mxu0 0.0
    %838 = vmatpush1.xpose.msra.mxu0 0.0
    %839 = vmatprep.subr.mxu0 0.0
    %840 = vmatpush1.xpose.msra.mxu0 0.0
    %841 = vmatprep.subr.mxu0 0.0
    %842 = vmatpush1.xpose.msra.mxu0 0.0
    %843 = vmatprep.subr.mxu0 0.0
    %844 = vmatpush1.xpose.msra.mxu0 0.0
    %845 = vmatprep.subr.mxu0 0.0
    %846 = vmatpush1.xpose.msra.mxu0 0.0
    %847 = vmatprep.subr.mxu0 0.0
    %848 = vmatpush1.xpose.msra.mxu0 0.0
    %849 = vmatprep.subr.mxu0 0.0
    %850 = vmatpush1.xpose.msra.mxu0 0.0
    %851 = vmatprep.subr.mxu0 0.0
    %852 = vmatpush1.xpose.msra.mxu0 0.0
    %853 = vmatprep.subr.mxu0 0.0
    %854 = vmatpush1.xpose.msra.mxu0 0.0
    %855 = vmatprep.subr.mxu0 0.0
    %856 = vmatpush1.xpose.msra.mxu0 0.0
    %857 = vmatprep.subr.mxu0 0.0
    %858 = vmatpush1.xpose.msra.mxu0 0.0
    %859 = vmatprep.mubr.f32.mxu0 0.0
    %860 = vmatmul.mubr.f32.gmra.mrb[0].mxu0 %v791
    %v861 = vpop.f32.mrb[0].mxu0
    %v862 = vadd.f32 0.0, %v861
    %v863 = vpop.f32.mrb[0].mxu0
    %864 = vdwg.mxu0
    %865 = vrot.lane.b32.xlu0 %v121, 112
    %v866 = vpop.permute.xlu0 %865
    %867 = vrot.lane.b32.xlu0 %v121, 80
    %v868 = vpop.permute.xlu0 %867
    %v869 = vsel %vm127, %v866, 0
    %v871 = vsel %vm127, %v868, 0
    %873 = vmatprep.subr.mxu0 0.0
    %874 = vmatpush1.xpose.msra.mxu0 %v871
    %875 = vmatprep.subr.mxu0 0.0
    %876 = vmatpush1.xpose.msra.mxu0 0.0
    %877 = vmatprep.subr.mxu0 0.0
    %878 = vmatpush1.xpose.msra.mxu0 0.0
    %879 = vmatprep.subr.mxu0 0.0
    %880 = vmatpush1.xpose.msra.mxu0 0.0
    %881 = vmatprep.subr.mxu0 0.0
    %882 = vmatpush1.xpose.msra.mxu0 0.0
    %883 = vmatprep.subr.mxu0 0.0
    %884 = vmatpush1.xpose.msra.mxu0 0.0
    %885 = vmatprep.subr.mxu0 0.0
    %886 = vmatpush1.xpose.msra.mxu0 0.0
    %887 = vmatprep.subr.mxu0 0.0
    %888 = vmatpush1.xpose.msra.mxu0 0.0
    %889 = vmatprep.subr.mxu0 0.0
    %890 = vmatpush1.xpose.msra.mxu0 0.0
    %891 = vmatprep.subr.mxu0 0.0
    %892 = vmatpush1.xpose.msra.mxu0 0.0
    %893 = vmatprep.subr.mxu0 0.0
    %894 = vmatpush1.xpose.msra.mxu0 0.0
    %895 = vmatprep.subr.mxu0 0.0
    %896 = vmatpush1.xpose.msra.mxu0 0.0
    %897 = vmatprep.subr.mxu0 0.0
    %898 = vmatpush1.xpose.msra.mxu0 0.0
    %899 = vmatprep.subr.mxu0 0.0
    %900 = vmatpush1.xpose.msra.mxu0 0.0
    %901 = vmatprep.subr.mxu0 0.0
    %902 = vmatpush1.xpose.msra.mxu0 0.0
    %903 = vmatprep.subr.mxu0 0.0
    %904 = vmatpush1.xpose.msra.mxu0 0.0
    %905 = vmatprep.subr.mxu0 0.0
    %906 = vmatpush1.xpose.msra.mxu0 0.0
    %907 = vmatprep.subr.mxu0 0.0
    %908 = vmatpush1.xpose.msra.mxu0 0.0
    %909 = vmatprep.subr.mxu0 0.0
    %910 = vmatpush1.xpose.msra.mxu0 0.0
    %911 = vmatprep.subr.mxu0 0.0
    %912 = vmatpush1.xpose.msra.mxu0 0.0
    %913 = vmatprep.subr.mxu0 0.0
    %914 = vmatpush1.xpose.msra.mxu0 0.0
    %915 = vmatprep.subr.mxu0 0.0
    %916 = vmatpush1.xpose.msra.mxu0 0.0
    %917 = vmatprep.subr.mxu0 0.0
    %918 = vmatpush1.xpose.msra.mxu0 0.0
    %919 = vmatprep.subr.mxu0 0.0
    %920 = vmatpush1.xpose.msra.mxu0 0.0
    %921 = vmatprep.subr.mxu0 0.0
    %922 = vmatpush1.xpose.msra.mxu0 0.0
    %923 = vmatprep.subr.mxu0 0.0
    %924 = vmatpush1.xpose.msra.mxu0 0.0
    %925 = vmatprep.subr.mxu0 0.0
    %926 = vmatpush1.xpose.msra.mxu0 0.0
    %927 = vmatprep.subr.mxu0 0.0
    %928 = vmatpush1.xpose.msra.mxu0 0.0
    %929 = vmatprep.subr.mxu0 0.0
    %930 = vmatpush1.xpose.msra.mxu0 0.0
    %931 = vmatprep.subr.mxu0 0.0
    %932 = vmatpush1.xpose.msra.mxu0 0.0
    %933 = vmatprep.subr.mxu0 0.0
    %934 = vmatpush1.xpose.msra.mxu0 0.0
    %935 = vmatprep.subr.mxu0 0.0
    %936 = vmatpush1.xpose.msra.mxu0 0.0
    %937 = vmatprep.mubr.f32.mxu0 0.0
    %938 = vmatmul.mubr.f32.gmra.mrb[0].mxu0 %v869
    %v939 = vpop.f32.mrb[0].mxu0
    %v940 = vadd.f32 0.0, %v939
    %v941 = vpop.f32.mrb[0].mxu0
    %942 = vdwg.mxu0
    %v943 = vmul.f32 %v862, 0.35355338
    %v944 = vmul.f32 %v940, 0.35355338
    %v945 = vsel %vm127, %v943, -inf
    %946 = vmax.xlane.f32.xlu0 %v945
    %v947 = vpop.xlane.xlu0 %946
    %v948 = vsel %vm127, %v944, -inf
    %949 = vmax.xlane.f32.xlu0 %v948
    %v950 = vpop.xlane.xlu0 %949
    %v951 = vsub.f32 %v943, %v947
    %v952 = vsub.f32 %v944, %v950
    %v953 = vmul.f32 %v951, 1.442695
    %v954 = vpow.pop %v953
    %v955 = vmul.f32 %v952, 1.442695
    %v956 = vpow.pop %v955
    %v957 = vsel %vm127, %v954, 0.0
    %958 = vadd.xlane.f32.xlu0 %v957
    %v959 = vpop.xlane.xlu0 %958
    %v960 = vsel %vm127, %v956, 0.0
    %961 = vadd.xlane.f32.xlu0 %v960
    %v962 = vpop.xlane.xlu0 %961
    %v963 = vrcp.pop %v959
    %v964 = vmul.f32 %v954, %v963
    %v965 = vrcp.pop %v962
    %v966 = vmul.f32 %v956, %v965
    %967 = vrot.lane.b32.xlu0 %v118, 48
    %v968 = vpop.permute.xlu0 %967
    %v971 = vsel %vm127, %v964, 0
    %973 = vmatprep.subr.mxu0 0.0
    %974 = vmatpush1.msra.mxu0 %v968
    %975 = vmatprep.subr.mxu0 0.0
    %976 = vmatpush1.msra.mxu0 0.0
    %977 = vmatprep.subr.mxu0 0.0
    %978 = vmatpush1.msra.mxu0 0.0
    %979 = vmatprep.subr.mxu0 0.0
    %980 = vmatpush1.msra.mxu0 0.0
    %981 = vmatprep.subr.mxu0 0.0
    %982 = vmatpush1.msra.mxu0 0.0
    %983 = vmatprep.subr.mxu0 0.0
    %984 = vmatpush1.msra.mxu0 0.0
    %985 = vmatprep.subr.mxu0 0.0
    %986 = vmatpush1.msra.mxu0 0.0
    %987 = vmatprep.subr.mxu0 0.0
    %988 = vmatpush1.msra.mxu0 0.0
    %989 = vmatprep.subr.mxu0 0.0
    %990 = vmatpush1.msra.mxu0 0.0
    %991 = vmatprep.subr.mxu0 0.0
    %992 = vmatpush1.msra.mxu0 0.0
    %993 = vmatprep.subr.mxu0 0.0
    %994 = vmatpush1.msra.mxu0 0.0
    %995 = vmatprep.subr.mxu0 0.0
    %996 = vmatpush1.msra.mxu0 0.0
    %997 = vmatprep.subr.mxu0 0.0
    %998 = vmatpush1.msra.mxu0 0.0
    %999 = vmatprep.subr.mxu0 0.0
    %1000 = vmatpush1.msra.mxu0 0.0
    %1001 = vmatprep.subr.mxu0 0.0
    %1002 = vmatpush1.msra.mxu0 0.0
    %1003 = vmatprep.subr.mxu0 0.0
    %1004 = vmatpush1.msra.mxu0 0.0
    %1005 = vmatprep.subr.mxu0 0.0
    %1006 = vmatpush1.msra.mxu0 0.0
    %1007 = vmatprep.subr.mxu0 0.0
    %1008 = vmatpush1.msra.mxu0 0.0
    %1009 = vmatprep.subr.mxu0 0.0
    %1010 = vmatpush1.msra.mxu0 0.0
    %1011 = vmatprep.subr.mxu0 0.0
    %1012 = vmatpush1.msra.mxu0 0.0
    %1013 = vmatprep.subr.mxu0 0.0
    %1014 = vmatpush1.msra.mxu0 0.0
    %1015 = vmatprep.subr.mxu0 0.0
    %1016 = vmatpush1.msra.mxu0 0.0
    %1017 = vmatprep.subr.mxu0 0.0
    %1018 = vmatpush1.msra.mxu0 0.0
    %1019 = vmatprep.subr.mxu0 0.0
    %1020 = vmatpush1.msra.mxu0 0.0
    %1021 = vmatprep.subr.mxu0 0.0
    %1022 = vmatpush1.msra.mxu0 0.0
    %1023 = vmatprep.subr.mxu0 0.0
    %1024 = vmatpush1.msra.mxu0 0.0
    %1025 = vmatprep.subr.mxu0 0.0
    %1026 = vmatpush1.msra.mxu0 0.0
    %1027 = vmatprep.subr.mxu0 0.0
    %1028 = vmatpush1.msra.mxu0 0.0
    %1029 = vmatprep.subr.mxu0 0.0
    %1030 = vmatpush1.msra.mxu0 0.0
    %1031 = vmatprep.subr.mxu0 0.0
    %1032 = vmatpush1.msra.mxu0 0.0
    %1033 = vmatprep.subr.mxu0 0.0
    %1034 = vmatpush1.msra.mxu0 0.0
    %1035 = vmatprep.subr.mxu0 0.0
    %1036 = vmatpush1.msra.mxu0 0.0
    %1037 = vmatprep.mubr.f32.mxu0 0.0
    %1038 = vmatmul.mubr.f32.gmra.mrb[0].mxu0 %v971
    %v1039 = vpop.f32.mrb[0].mxu0
    %v1040 = vadd.f32 0.0, %v1039
    %v1041 = vpop.f32.mrb[0].mxu0
    %1042 = vdwg.mxu0
    %1043 = vrot.lane.b32.xlu0 %v121, 48
    %v1044 = vpop.permute.xlu0 %1043
    %v1047 = vsel %vm127, %v966, 0
    %1049 = vmatprep.subr.mxu0 0.0
    %1050 = vmatpush1.msra.mxu0 %v1044
    %1051 = vmatprep.subr.mxu0 0.0
    %1052 = vmatpush1.msra.mxu0 0.0
    %1053 = vmatprep.subr.mxu0 0.0
    %1054 = vmatpush1.msra.mxu0 0.0
    %1055 = vmatprep.subr.mxu0 0.0
    %1056 = vmatpush1.msra.mxu0 0.0
    %1057 = vmatprep.subr.mxu0 0.0
    %1058 = vmatpush1.msra.mxu0 0.0
    %1059 = vmatprep.subr.mxu0 0.0
    %1060 = vmatpush1.msra.mxu0 0.0
    %1061 = vmatprep.subr.mxu0 0.0
    %1062 = vmatpush1.msra.mxu0 0.0
    %1063 = vmatprep.subr.mxu0 0.0
    %1064 = vmatpush1.msra.mxu0 0.0
    %1065 = vmatprep.subr.mxu0 0.0
    %1066 = vmatpush1.msra.mxu0 0.0
    %1067 = vmatprep.subr.mxu0 0.0
    %1068 = vmatpush1.msra.mxu0 0.0
    %1069 = vmatprep.subr.mxu0 0.0
    %1070 = vmatpush1.msra.mxu0 0.0
    %1071 = vmatprep.subr.mxu0 0.0
    %1072 = vmatpush1.msra.mxu0 0.0
    %1073 = vmatprep.subr.mxu0 0.0
    %1074 = vmatpush1.msra.mxu0 0.0
    %1075 = vmatprep.subr.mxu0 0.0
    %1076 = vmatpush1.msra.mxu0 0.0
    %1077 = vmatprep.subr.mxu0 0.0
    %1078 = vmatpush1.msra.mxu0 0.0
    %1079 = vmatprep.subr.mxu0 0.0
    %1080 = vmatpush1.msra.mxu0 0.0
    %1081 = vmatprep.subr.mxu0 0.0
    %1082 = vmatpush1.msra.mxu0 0.0
    %1083 = vmatprep.subr.mxu0 0.0
    %1084 = vmatpush1.msra.mxu0 0.0
    %1085 = vmatprep.subr.mxu0 0.0
    %1086 = vmatpush1.msra.mxu0 0.0
    %1087 = vmatprep.subr.mxu0 0.0
    %1088 = vmatpush1.msra.mxu0 0.0
    %1089 = vmatprep.subr.mxu0 0.0
    %1090 = vmatpush1.msra.mxu0 0.0
    %1091 = vmatprep.subr.mxu0 0.0
    %1092 = vmatpush1.msra.mxu0 0.0
    %1093 = vmatprep.subr.mxu0 0.0
    %1094 = vmatpush1.msra.mxu0 0.0
    %1095 = vmatprep.subr.mxu0 0.0
    %1096 = vmatpush1.msra.mxu0 0.0
    %1097 = vmatprep.subr.mxu0 0.0
    %1098 = vmatpush1.msra.mxu0 0.0
    %1099 = vmatprep.subr.mxu0 0.0
    %1100 = vmatpush1.msra.mxu0 0.0
    %1101 = vmatprep.subr.mxu0 0.0
    %1102 = vmatpush1.msra.mxu0 0.0
    %1103 = vmatprep.subr.mxu0 0.0
    %1104 = vmatpush1.msra.mxu0 0.0
    %1105 = vmatprep.subr.mxu0 0.0
    %1106 = vmatpush1.msra.mxu0 0.0
    %1107 = vmatprep.subr.mxu0 0.0
    %1108 = vmatpush1.msra.mxu0 0.0
    %1109 = vmatprep.subr.mxu0 0.0
    %1110 = vmatpush1.msra.mxu0 0.0
    %1111 = vmatprep.subr.mxu0 0.0
    %1112 = vmatpush1.msra.mxu0 0.0
    %1113 = vmatprep.mubr.f32.mxu0 0.0
    %1114 = vmatmul.mubr.f32.gmra.mrb[0].mxu0 %v1047
    %v1115 = vpop.f32.mrb[0].mxu0
    %v1116 = vadd.f32 0.0, %v1115
    %v1117 = vpop.f32.mrb[0].mxu0
    %1118 = vdwg.mxu0
    %1119 = vrot.lane.b32.xlu0 %v118, 104
    %v1120 = vpop.permute.xlu0 %1119
    %1121 = vrot.lane.b32.xlu0 %v118, 72
    %v1122 = vpop.permute.xlu0 %1121
    %v1123 = vsel %vm127, %v1120, 0
    %v1125 = vsel %vm127, %v1122, 0
    %1127 = vmatprep.subr.mxu0 0.0
    %1128 = vmatpush1.xpose.msra.mxu0 %v1125
    %1129 = vmatprep.subr.mxu0 0.0
    %1130 = vmatpush1.xpose.msra.mxu0 0.0
    %1131 = vmatprep.subr.mxu0 0.0
    %1132 = vmatpush1.xpose.msra.mxu0 0.0
    %1133 = vmatprep.subr.mxu0 0.0
    %1134 = vmatpush1.xpose.msra.mxu0 0.0
    %1135 = vmatprep.subr.mxu0 0.0
    %1136 = vmatpush1.xpose.msra.mxu0 0.0
    %1137 = vmatprep.subr.mxu0 0.0
    %1138 = vmatpush1.xpose.msra.mxu0 0.0
    %1139 = vmatprep.subr.mxu0 0.0
    %1140 = vmatpush1.xpose.msra.mxu0 0.0
    %1141 = vmatprep.subr.mxu0 0.0
    %1142 = vmatpush1.xpose.msra.mxu0 0.0
    %1143 = vmatprep.subr.mxu0 0.0
    %1144 = vmatpush1.xpose.msra.mxu0 0.0
    %1145 = vmatprep.subr.mxu0 0.0
    %1146 = vmatpush1.xpose.msra.mxu0 0.0
    %1147 = vmatprep.subr.mxu0 0.0
    %1148 = vmatpush1.xpose.msra.mxu0 0.0
    %1149 = vmatprep.subr.mxu0 0.0
    %1150 = vmatpush1.xpose.msra.mxu0 0.0
    %1151 = vmatprep.subr.mxu0 0.0
    %1152 = vmatpush1.xpose.msra.mxu0 0.0
    %1153 = vmatprep.subr.mxu0 0.0
    %1154 = vmatpush1.xpose.msra.mxu0 0.0
    %1155 = vmatprep.subr.mxu0 0.0
    %1156 = vmatpush1.xpose.msra.mxu0 0.0
    %1157 = vmatprep.subr.mxu0 0.0
    %1158 = vmatpush1.xpose.msra.mxu0 0.0
    %1159 = vmatprep.subr.mxu0 0.0
    %1160 = vmatpush1.xpose.msra.mxu0 0.0
    %1161 = vmatprep.subr.mxu0 0.0
    %1162 = vmatpush1.xpose.msra.mxu0 0.0
    %1163 = vmatprep.subr.mxu0 0.0
    %1164 = vmatpush1.xpose.msra.mxu0 0.0
    %1165 = vmatprep.subr.mxu0 0.0
    %1166 = vmatpush1.xpose.msra.mxu0 0.0
    %1167 = vmatprep.subr.mxu0 0.0
    %1168 = vmatpush1.xpose.msra.mxu0 0.0
    %1169 = vmatprep.subr.mxu0 0.0
    %1170 = vmatpush1.xpose.msra.mxu0 0.0
    %1171 = vmatprep.subr.mxu0 0.0
    %1172 = vmatpush1.xpose.msra.mxu0 0.0
    %1173 = vmatprep.subr.mxu0 0.0
    %1174 = vmatpush1.xpose.msra.mxu0 0.0
    %1175 = vmatprep.subr.mxu0 0.0
    %1176 = vmatpush1.xpose.msra.mxu0 0.0
    %1177 = vmatprep.subr.mxu0 0.0
    %1178 = vmatpush1.xpose.msra.mxu0 0.0
    %1179 = vmatprep.subr.mxu0 0.0
    %1180 = vmatpush1.xpose.msra.mxu0 0.0
    %1181 = vmatprep.subr.mxu0 0.0
    %1182 = vmatpush1.xpose.msra.mxu0 0.0
    %1183 = vmatprep.subr.mxu0 0.0
    %1184 = vmatpush1.xpose.msra.mxu0 0.0
    %1185 = vmatprep.subr.mxu0 0.0
    %1186 = vmatpush1.xpose.msra.mxu0 0.0
    %1187 = vmatprep.subr.mxu0 0.0
    %1188 = vmatpush1.xpose.msra.mxu0 0.0
    %1189 = vmatprep.subr.mxu0 0.0
    %1190 = vmatpush1.xpose.msra.mxu0 0.0
    %1191 = vmatprep.mubr.f32.mxu0 0.0
    %1192 = vmatmul.mubr.f32.gmra.mrb[0].mxu0 %v1123
    %v1193 = vpop.f32.mrb[0].mxu0
    %v1194 = vadd.f32 0.0, %v1193
    %v1195 = vpop.f32.mrb[0].mxu0
    %1196 = vdwg.mxu0
    %1197 = vrot.lane.b32.xlu0 %v121, 104
    %v1198 = vpop.permute.xlu0 %1197
    %1199 = vrot.lane.b32.xlu0 %v121, 72
    %v1200 = vpop.permute.xlu0 %1199
    %v1201 = vsel %vm127, %v1198, 0
    %v1203 = vsel %vm127, %v1200, 0
    %1205 = vmatprep.subr.mxu0 0.0
    %1206 = vmatpush1.xpose.msra.mxu0 %v1203
    %1207 = vmatprep.subr.mxu0 0.0
    %1208 = vmatpush1.xpose.msra.mxu0 0.0
    %1209 = vmatprep.subr.mxu0 0.0
    %1210 = vmatpush1.xpose.msra.mxu0 0.0
    %1211 = vmatprep.subr.mxu0 0.0
    %1212 = vmatpush1.xpose.msra.mxu0 0.0
    %1213 = vmatprep.subr.mxu0 0.0
    %1214 = vmatpush1.xpose.msra.mxu0 0.0
    %1215 = vmatprep.subr.mxu0 0.0
    %1216 = vmatpush1.xpose.msra.mxu0 0.0
    %1217 = vmatprep.subr.mxu0 0.0
    %1218 = vmatpush1.xpose.msra.mxu0 0.0
    %1219 = vmatprep.subr.mxu0 0.0
    %1220 = vmatpush1.xpose.msra.mxu0 0.0
    %1221 = vmatprep.subr.mxu0 0.0
    %1222 = vmatpush1.xpose.msra.mxu0 0.0
    %1223 = vmatprep.subr.mxu0 0.0
    %1224 = vmatpush1.xpose.msra.mxu0 0.0
    %1225 = vmatprep.subr.mxu0 0.0
    %1226 = vmatpush1.xpose.msra.mxu0 0.0
    %1227 = vmatprep.subr.mxu0 0.0
    %1228 = vmatpush1.xpose.msra.mxu0 0.0
    %1229 = vmatprep.subr.mxu0 0.0
    %1230 = vmatpush1.xpose.msra.mxu0 0.0
    %1231 = vmatprep.subr.mxu0 0.0
    %1232 = vmatpush1.xpose.msra.mxu0 0.0
    %1233 = vmatprep.subr.mxu0 0.0
    %1234 = vmatpush1.xpose.msra.mxu0 0.0
    %1235 = vmatprep.subr.mxu0 0.0
    %1236 = vmatpush1.xpose.msra.mxu0 0.0
    %1237 = vmatprep.subr.mxu0 0.0
    %1238 = vmatpush1.xpose.msra.mxu0 0.0
    %1239 = vmatprep.subr.mxu0 0.0
    %1240 = vmatpush1.xpose.msra.mxu0 0.0
    %1241 = vmatprep.subr.mxu0 0.0
    %1242 = vmatpush1.xpose.msra.mxu0 0.0
    %1243 = vmatprep.subr.mxu0 0.0
    %1244 = vmatpush1.xpose.msra.mxu0 0.0
    %1245 = vmatprep.subr.mxu0 0.0
    %1246 = vmatpush1.xpose.msra.mxu0 0.0
    %1247 = vmatprep.subr.mxu0 0.0
    %1248 = vmatpush1.xpose.msra.mxu0 0.0
    %1249 = vmatprep.subr.mxu0 0.0
    %1250 = vmatpush1.xpose.msra.mxu0 0.0
    %1251 = vmatprep.subr.mxu0 0.0
    %1252 = vmatpush1.xpose.msra.mxu0 0.0
    %1253 = vmatprep.subr.mxu0 0.0
    %1254 = vmatpush1.xpose.msra.mxu0 0.0
    %1255 = vmatprep.subr.mxu0 0.0
    %1256 = vmatpush1.xpose.msra.mxu0 0.0
    %1257 = vmatprep.subr.mxu0 0.0
    %1258 = vmatpush1.xpose.msra.mxu0 0.0
    %1259 = vmatprep.subr.mxu0 0.0
    %1260 = vmatpush1.xpose.msra.mxu0 0.0
    %1261 = vmatprep.subr.mxu0 0.0
    %1262 = vmatpush1.xpose.msra.mxu0 0.0
    %1263 = vmatprep.subr.mxu0 0.0
    %1264 = vmatpush1.xpose.msra.mxu0 0.0
    %1265 = vmatprep.subr.mxu0 0.0
    %1266 = vmatpush1.xpose.msra.mxu0 0.0
    %1267 = vmatprep.subr.mxu0 0.0
    %1268 = vmatpush1.xpose.msra.mxu0 0.0
    %1269 = vmatprep.mubr.f32.mxu0 0.0
    %1270 = vmatmul.mubr.f32.gmra.mrb[0].mxu0 %v1201
    %v1271 = vpop.f32.mrb[0].mxu0
    %v1272 = vadd.f32 0.0, %v1271
    %v1273 = vpop.f32.mrb[0].mxu0
    %1274 = vdwg.mxu0
    %v1275 = vmul.f32 %v1194, 0.35355338
    %v1276 = vmul.f32 %v1272, 0.35355338
    %v1277 = vsel %vm127, %v1275, -inf
    %1278 = vmax.xlane.f32.xlu0 %v1277
    %v1279 = vpop.xlane.xlu0 %1278
    %v1280 = vsel %vm127, %v1276, -inf
    %1281 = vmax.xlane.f32.xlu0 %v1280
    %v1282 = vpop.xlane.xlu0 %1281
    %v1283 = vsub.f32 %v1275, %v1279
    %v1284 = vsub.f32 %v1276, %v1282
    %v1285 = vmul.f32 %v1283, 1.442695
    %v1286 = vpow.pop %v1285
    %v1287 = vmul.f32 %v1284, 1.442695
    %v1288 = vpow.pop %v1287
    %v1289 = vsel %vm127, %v1286, 0.0
    %1290 = vadd.xlane.f32.xlu0 %v1289
    %v1291 = vpop.xlane.xlu0 %1290
    %v1292 = vsel %vm127, %v1288, 0.0
    %1293 = vadd.xlane.f32.xlu0 %v1292
    %v1294 = vpop.xlane.xlu0 %1293
    %v1295 = vrcp.pop %v1291
    %v1296 = vmul.f32 %v1286, %v1295
    %v1297 = vrcp.pop %v1294
    %v1298 = vmul.f32 %v1288, %v1297
    %1299 = vrot.lane.b32.xlu0 %v118, 40
    %v1300 = vpop.permute.xlu0 %1299
    %v1303 = vsel %vm127, %v1296, 0
    %1305 = vmatprep.subr.mxu0 0.0
    %1306 = vmatpush1.msra.mxu0 %v1300
    %1307 = vmatprep.subr.mxu0 0.0
    %1308 = vmatpush1.msra.mxu0 0.0
    %1309 = vmatprep.subr.mxu0 0.0
    %1310 = vmatpush1.msra.mxu0 0.0
    %1311 = vmatprep.subr.mxu0 0.0
    %1312 = vmatpush1.msra.mxu0 0.0
    %1313 = vmatprep.subr.mxu0 0.0
    %1314 = vmatpush1.msra.mxu0 0.0
    %1315 = vmatprep.subr.mxu0 0.0
    %1316 = vmatpush1.msra.mxu0 0.0
    %1317 = vmatprep.subr.mxu0 0.0
    %1318 = vmatpush1.msra.mxu0 0.0
    %1319 = vmatprep.subr.mxu0 0.0
    %1320 = vmatpush1.msra.mxu0 0.0
    %1321 = vmatprep.subr.mxu0 0.0
    %1322 = vmatpush1.msra.mxu0 0.0
    %1323 = vmatprep.subr.mxu0 0.0
    %1324 = vmatpush1.msra.mxu0 0.0
    %1325 = vmatprep.subr.mxu0 0.0
    %1326 = vmatpush1.msra.mxu0 0.0
    %1327 = vmatprep.subr.mxu0 0.0
    %1328 = vmatpush1.msra.mxu0 0.0
    %1329 = vmatprep.subr.mxu0 0.0
    %1330 = vmatpush1.msra.mxu0 0.0
    %1331 = vmatprep.subr.mxu0 0.0
    %1332 = vmatpush1.msra.mxu0 0.0
    %1333 = vmatprep.subr.mxu0 0.0
    %1334 = vmatpush1.msra.mxu0 0.0
    %1335 = vmatprep.subr.mxu0 0.0
    %1336 = vmatpush1.msra.mxu0 0.0
    %1337 = vmatprep.subr.mxu0 0.0
    %1338 = vmatpush1.msra.mxu0 0.0
    %1339 = vmatprep.subr.mxu0 0.0
    %1340 = vmatpush1.msra.mxu0 0.0
    %1341 = vmatprep.subr.mxu0 0.0
    %1342 = vmatpush1.msra.mxu0 0.0
    %1343 = vmatprep.subr.mxu0 0.0
    %1344 = vmatpush1.msra.mxu0 0.0
    %1345 = vmatprep.subr.mxu0 0.0
    %1346 = vmatpush1.msra.mxu0 0.0
    %1347 = vmatprep.subr.mxu0 0.0
    %1348 = vmatpush1.msra.mxu0 0.0
    %1349 = vmatprep.subr.mxu0 0.0
    %1350 = vmatpush1.msra.mxu0 0.0
    %1351 = vmatprep.subr.mxu0 0.0
    %1352 = vmatpush1.msra.mxu0 0.0
    %1353 = vmatprep.subr.mxu0 0.0
    %1354 = vmatpush1.msra.mxu0 0.0
    %1355 = vmatprep.subr.mxu0 0.0
    %1356 = vmatpush1.msra.mxu0 0.0
    %1357 = vmatprep.subr.mxu0 0.0
    %1358 = vmatpush1.msra.mxu0 0.0
    %1359 = vmatprep.subr.mxu0 0.0
    %1360 = vmatpush1.msra.mxu0 0.0
    %1361 = vmatprep.subr.mxu0 0.0
    %1362 = vmatpush1.msra.mxu0 0.0
    %1363 = vmatprep.subr.mxu0 0.0
    %1364 = vmatpush1.msra.mxu0 0.0
    %1365 = vmatprep.subr.mxu0 0.0
    %1366 = vmatpush1.msra.mxu0 0.0
    %1367 = vmatprep.subr.mxu0 0.0
    %1368 = vmatpush1.msra.mxu0 0.0
    %1369 = vmatprep.mubr.f32.mxu0 0.0
    %1370 = vmatmul.mubr.f32.gmra.mrb[0].mxu0 %v1303
    %v1371 = vpop.f32.mrb[0].mxu0
    %v1372 = vadd.f32 0.0, %v1371
    %v1373 = vpop.f32.mrb[0].mxu0
    %1374 = vdwg.mxu0
    %1375 = vrot.lane.b32.xlu0 %v121, 40
    %v1376 = vpop.permute.xlu0 %1375
    %v1379 = vsel %vm127, %v1298, 0
    %1381 = vmatprep.subr.mxu0 0.0
    %1382 = vmatpush1.msra.mxu0 %v1376
    %1383 = vmatprep.subr.mxu0 0.0
    %1384 = vmatpush1.msra.mxu0 0.0
    %1385 = vmatprep.subr.mxu0 0.0
    %1386 = vmatpush1.msra.mxu0 0.0
    %1387 = vmatprep.subr.mxu0 0.0
    %1388 = vmatpush1.msra.mxu0 0.0
    %1389 = vmatprep.subr.mxu0 0.0
    %1390 = vmatpush1.msra.mxu0 0.0
    %1391 = vmatprep.subr.mxu0 0.0
    %1392 = vmatpush1.msra.mxu0 0.0
    %1393 = vmatprep.subr.mxu0 0.0
    %1394 = vmatpush1.msra.mxu0 0.0
    %1395 = vmatprep.subr.mxu0 0.0
    %1396 = vmatpush1.msra.mxu0 0.0
    %1397 = vmatprep.subr.mxu0 0.0
    %1398 = vmatpush1.msra.mxu0 0.0
    %1399 = vmatprep.subr.mxu0 0.0
    %1400 = vmatpush1.msra.mxu0 0.0
    %1401 = vmatprep.subr.mxu0 0.0
    %1402 = vmatpush1.msra.mxu0 0.0
    %1403 = vmatprep.subr.mxu0 0.0
    %1404 = vmatpush1.msra.mxu0 0.0
    %1405 = vmatprep.subr.mxu0 0.0
    %1406 = vmatpush1.msra.mxu0 0.0
    %1407 = vmatprep.subr.mxu0 0.0
    %1408 = vmatpush1.msra.mxu0 0.0
    %1409 = vmatprep.subr.mxu0 0.0
    %1410 = vmatpush1.msra.mxu0 0.0
    %1411 = vmatprep.subr.mxu0 0.0
    %1412 = vmatpush1.msra.mxu0 0.0
    %1413 = vmatprep.subr.mxu0 0.0
    %1414 = vmatpush1.msra.mxu0 0.0
    %1415 = vmatprep.subr.mxu0 0.0
    %1416 = vmatpush1.msra.mxu0 0.0
    %1417 = vmatprep.subr.mxu0 0.0
    %1418 = vmatpush1.msra.mxu0 0.0
    %1419 = vmatprep.subr.mxu0 0.0
    %1420 = vmatpush1.msra.mxu0 0.0
    %1421 = vmatprep.subr.mxu0 0.0
    %1422 = vmatpush1.msra.mxu0 0.0
    %1423 = vmatprep.subr.mxu0 0.0
    %1424 = vmatpush1.msra.mxu0 0.0
    %1425 = vmatprep.subr.mxu0 0.0
    %1426 = vmatpush1.msra.mxu0 0.0
    %1427 = vmatprep.subr.mxu0 0.0
    %1428 = vmatpush1.msra.mxu0 0.0
    %1429 = vmatprep.subr.mxu0 0.0
    %1430 = vmatpush1.msra.mxu0 0.0
    %1431 = vmatprep.subr.mxu0 0.0
    %1432 = vmatpush1.msra.mxu0 0.0
    %1433 = vmatprep.subr.mxu0 0.0
    %1434 = vmatpush1.msra.mxu0 0.0
    %1435 = vmatprep.subr.mxu0 0.0
    %1436 = vmatpush1.msra.mxu0 0.0
    %1437 = vmatprep.subr.mxu0 0.0
    %1438 = vmatpush1.msra.mxu0 0.0
    %1439 = vmatprep.subr.mxu0 0.0
    %1440 = vmatpush1.msra.mxu0 0.0
    %1441 = vmatprep.subr.mxu0 0.0
    %1442 = vmatpush1.msra.mxu0 0.0
    %1443 = vmatprep.subr.mxu0 0.0
    %1444 = vmatpush1.msra.mxu0 0.0
    %1445 = vmatprep.mubr.f32.mxu0 0.0
    %1446 = vmatmul.mubr.f32.gmra.mrb[0].mxu0 %v1379
    %v1447 = vpop.f32.mrb[0].mxu0
    %v1448 = vadd.f32 0.0, %v1447
    %v1449 = vpop.f32.mrb[0].mxu0
    %1450 = vdwg.mxu0
    %1453 = vrot.lane.b32.xlu0 %v708, 8
    %v1454 = vpop.permute.xlu0 %1453
    %1455 = vrot.lane.b32.xlu0 %v784, 8
    %v1456 = vpop.permute.xlu0 %1455
    %1461 = vrot.lane.b32.xlu0 %v1040, 16
    %v1462 = vpop.permute.xlu0 %1461
    %1463 = vrot.lane.b32.xlu0 %v1116, 16
    %v1464 = vpop.permute.xlu0 %1463
    %1469 = vrot.lane.b32.xlu0 %v1372, 24
    %v1470 = vpop.permute.xlu0 %1469
    %1471 = vrot.lane.b32.xlu0 %v1448, 24
    %v1472 = vpop.permute.xlu0 %1471
    %v1475 = vsel %vm127, %v376, %v1454
    %v1476 = vsel %vm127, %v452, %v1456
    %vm1477 = vcmask 130048
    %v1478 = vsel %vm1477, %v1475, %v1462
    %v1479 = vsel %vm1477, %v1476, %v1464
    %vm1480 = vcmask 195584
    %v1481 = vsel %vm1480, %v1478, %v1470
    %v1482 = vsel %vm1480, %v1479, %v1472
    %v1483 = vpack.c.bf16 %v1482, %v1481
    %v1484 = vld [vmem:[#allocation7] sm:$0xf]
    %v1485 = vld [vmem:[#allocation7 + $0x4] sm:$0xf]
    %v1486 = vld [vmem:[#allocation7 + $0x8] sm:$0xf]
    %v1487 = vld [vmem:[#allocation7 + $0xc] sm:$0xf]
    %v1488 = vld [vmem:[%s3] sm:$0x1]
    %v1490 = vlaneseq
    %v1491 = vshrl.u32 %v1490, 7
    %v1492 = vsub.s32 0, %v1491
    %v1493 = vrot.slane %v1488, %v1492
    %v1499 = vunpack.c.l.b16 %v1484
    %v1500 = vunpack.c.l.b16 %v1485
    %v1501 = vunpack.c.l.b16 %v1486
    %v1502 = vunpack.c.l.b16 %v1487
    %v1503 = vpack.c.b16 %v1500, %v1499
    %v1504 = vpack.c.b16 %v1502, %v1501
    %v1508 = vsel %vm79, %v1483, 0
    %1510 = vmatprep.subr.bf16.mxu0 0
    %1511 = vmatpush1.bf16.msra.mxu0 %v1503
    %1512 = vmatprep.subr.bf16.mxu0 0
    %1513 = vmatpush1.bf16.msra.mxu0 %v1504
    %1514 = vmatprep.subr.bf16.mxu0 0
    %1515 = vmatpush1.bf16.msra.mxu0 0
    %1516 = vmatprep.subr.bf16.mxu0 0
    %1517 = vmatpush1.bf16.msra.mxu0 0
    %1518 = vmatprep.subr.bf16.mxu0 0
    %1519 = vmatpush1.bf16.msra.mxu0 0
    %1520 = vmatprep.subr.bf16.mxu0 0
    %1521 = vmatpush1.bf16.msra.mxu0 0
    %1522 = vmatprep.subr.bf16.mxu0 0
    %1523 = vmatpush1.bf16.msra.mxu0 0
    %1524 = vmatprep.subr.bf16.mxu0 0
    %1525 = vmatpush1.bf16.msra.mxu0 0
    %1526 = vmatprep.subr.bf16.mxu0 0
    %1527 = vmatpush1.bf16.msra.mxu0 0
    %1528 = vmatprep.subr.bf16.mxu0 0
    %1529 = vmatpush1.bf16.msra.mxu0 0
    %1530 = vmatprep.subr.bf16.mxu0 0
    %1531 = vmatpush1.bf16.msra.mxu0 0
    %1532 = vmatprep.subr.bf16.mxu0 0
    %1533 = vmatpush1.bf16.msra.mxu0 0
    %1534 = vmatprep.subr.bf16.mxu0 0
    %1535 = vmatpush1.bf16.msra.mxu0 0
    %1536 = vmatprep.subr.bf16.mxu0 0
    %1537 = vmatpush1.bf16.msra.mxu0 0
    %1538 = vmatprep.subr.bf16.mxu0 0
    %1539 = vmatpush1.bf16.msra.mxu0 0
    %1540 = vmatprep.subr.bf16.mxu0 0
    %1541 = vmatpush1.bf16.msra.mxu0 0
    %1542 = vmatprep.mubr.bf16.mxu0 0
    %1543 = vmatmul.mubr.bf16.gmra.mrb[0].mxu0 %v1508
    %v1544 = vpop.f32.mrb[0].mxu0
    %v1545 = vadd.f32 %v1493, %v1544
    %v1546 = vpop.f32.mrb[0].mxu0
    %v1547 = vpop.f32.mrb[0].mxu0
    %v1548 = vadd.f32 %v1493, %v1547
    %v1549 = vpop.f32.mrb[0].mxu0
    %1550 = vdwg.mxu0
    %1551 = vst.msk [vmem:[#allocation8] sm:$0xff] %vm79, %v1545
    %1552 = vst.msk [vmem:[#allocation8 + $0x8] sm:$0xff] %vm79, %v1548
    // Predicated region
    $region30: #{tpu_custom_call.1} parent=1 // pred_check
      _
    $region31: #{tpu_custom_call.1} parent=1 // pred_check_branch
      %1554 = sbr.rel (0) target = $region33
    $region32: #{tpu_custom_call.1} parent=1 // pred_region
      %s1556 = ssub.s32 256, 256
      %1557 = vsyncadd [#allocation4], %s1556
      %s1558 = sshll.u32 [#allocation8], 4
      %s1559 = int_to_ptr.vmem [resolvable:$true] %s1558
      %1564 = dma.vmem_to_hbm [thread:$0]  %s1559, 256, %s4, [#allocation4], 128, 128, 8
    $region33: #{tpu_custom_call.1} parent=1 // pred_fallthru
      _
    // Predicated region
    $region34: #{tpu_custom_call.1} parent=1 // pred_check
      _
    $region35: #{tpu_custom_call.1} parent=1 // pred_check_branch
      %1566 = sbr.rel (0) target = $region37
    $region36: #{tpu_custom_call.1} parent=1 // pred_region
      %1567 = dma.done [#allocation4], 256
    $region37: #{tpu_custom_call.1} parent=1 // pred_fallthru
      _
    %1568 = vsyncpa [#allocation3], 1
    %1569 = vsyncpa [#allocation6], 1
    %1570 = vsyncpa [#allocation4], 1

</llo_original>
